<compile_context>
chip_gen: v7x
topology: tpu7x:2x2x1
jax: 0.10.0
libtpu: 0.0.40
codegen_flags: <defaults>
</compile_context>

<pallas_src>
import functools

import jax
import jax.numpy as jnp
from jax.experimental import pallas as pl
from jax.experimental.pallas import tpu as pltpu


def _round_up(x, m):
    return ((x + m - 1) // m) * m


def _mlp_kernel(x_ref,
                w1_ref, b1_ref,
                w2_ref, b2_ref,
                w3_ref, b3_ref,
                w4_ref, b4_ref,
                w5_ref, b5_ref,
                o_ref):
    """Fused forward pass for one batch tile (all weights resident in VMEM)."""

    def layer(h_bf16, w_ref, b_ref, relu):
        # bf16 x bf16 -> f32 accumulation on the MXU.
        y = jnp.dot(h_bf16, w_ref[...], preferred_element_type=jnp.float32)
        y = y + b_ref[...]                       # folded (bias + eval-BN) in f32
        if relu:
            y = jnp.maximum(y, 0.0)              # ReLU (dropout = identity in eval mode)
            return y.astype(jnp.bfloat16)        # feed next MXU pass in bf16
        return y                                 # final logits stay f32

    h = x_ref[...]                               # bf16 (batch_tile, F)
    h = layer(h, w1_ref, b1_ref, True)
    h = layer(h, w2_ref, b2_ref, True)
    h = layer(h, w3_ref, b3_ref, True)
    h = layer(h, w4_ref, b4_ref, True)
    logits = layer(h, w5_ref, b5_ref, False)
    o_ref[...] = jax.nn.sigmoid(logits).astype(o_ref.dtype)   # sigmoid on the EUP


def four_hidden_layers_forward(x, params, *, batch_tile=256):
    """Run the fused MLP.

    x: (B, n_features) float32 (cast to bf16 internally).
    params: dict from prepare_inference_params: w{1..5} bf16 (in, out), b{1..5} f32 (1, out)
            with eval-mode BatchNorm already folded into w1..w4 / b1..b4.
    """
    B, F = x.shape
    C = params["w5"].shape[1]

    # ---- batch tiling: tile is a multiple of 8 sublanes; batch padded to a tile multiple ----
    bt = min(batch_tile, _round_up(B, 8))
    bt = max(8, _round_up(bt, 8))
    Bp = _round_up(B, bt)
    xb = x.astype(jnp.bfloat16)
    if Bp != B:
        xb = jnp.pad(xb, ((0, Bp - B), (0, 0)))

    # ---- lane-align the classifier head (unmasked lane-dense output stores) ----
    Cp = _round_up(C, 128)
    w5, b5 = params["w5"], params["b5"]
    if Cp != C:
        w5 = jnp.pad(w5, ((0, 0), (0, Cp - C)))
        b5 = jnp.pad(b5, ((0, 0), (0, Cp - C)))

    flat_params = [
        params["w1"], params["b1"],
        params["w2"], params["b2"],
        params["w3"], params["b3"],
        params["w4"], params["b4"],
        w5, b5,
    ]

    # ---- explicit VMEM budget: 2x (double-buffered) params + f32 temporaries + IO tiles ----
    param_bytes = sum(int(p.size) * p.dtype.itemsize for p in flat_params)
    widths = [F, params["w1"].shape[1], params["w2"].shape[1],
              params["w3"].shape[1], params["w4"].shape[1], Cp]
    act_bytes = 6 * bt * max(widths) * 4            # f32 layer temporaries (generous)
    io_bytes = 2 * (bt * F * 2 + bt * Cp * 4)       # double-buffered x tile + out tile
    est = 2 * param_bytes + act_bytes + io_bytes
    vmem_limit_bytes = int(min(max(int(est * 1.25) + (4 << 20), 32 << 20), 48 << 20))

    # Full-array specs with constant index_map: fetched once, revisited every grid step.
    def full(arr):
        return pl.BlockSpec(arr.shape, lambda i: (0,) * arr.ndim)

    out = pl.pallas_call(
        _mlp_kernel,
        out_shape=jax.ShapeDtypeStruct((Bp, Cp), jnp.float32),
        grid_spec=pltpu.PrefetchScalarGridSpec(
            num_scalar_prefetch=0,
            grid=(Bp // bt,),
            in_specs=[pl.BlockSpec((bt, F), lambda i: (i, 0))]
                     + [full(p) for p in flat_params],
            out_specs=pl.BlockSpec((bt, Cp), lambda i: (i, 0)),
        ),
        compiler_params=pltpu.CompilerParams(
            dimension_semantics=("parallel",),
            vmem_limit_bytes=vmem_limit_bytes,
        ),
    )(xb, *flat_params)

    out = out[:B, :C]
    # torch's .squeeze(-1): only removes the last axis when it has size 1.
    if C == 1:
        out = out[..., 0]
    return out


def make_params(key, n_features, n_classes, h1_in, h1_out, h2_out, h3_out):
    """Deterministic synthetic parameters in PyTorch layout:
       weight{l}: (out, in), bias{l}: (out,), BN gamma/beta/mean/var: (out,) for layers 1..4."""
    dims = [(n_features, h1_in), (h1_in, h1_out), (h1_out, h2_out),
            (h2_out, h3_out), (h3_out, n_classes)]
    raw = {}
    keys = jax.random.split(key, 6 * len(dims))
    ki = 0
    for li, (din, dout) in enumerate(dims, start=1):
        bound = 1.0 / jnp.sqrt(jnp.float32(din))
        raw[f"weight{li}"] = jax.random.uniform(keys[ki], (dout, din), jnp.float32,
                                                -bound, bound); ki += 1
        raw[f"bias{li}"] = jax.random.uniform(keys[ki], (dout,), jnp.float32,
                                              -bound, bound); ki += 1
        if li <= 4:  # BatchNorm1d follows the first four linears only
            raw[f"gamma{li}"] = 1.0 + 0.1 * jax.random.normal(keys[ki], (dout,), jnp.float32); ki += 1
            raw[f"beta{li}"] = 0.1 * jax.random.normal(keys[ki], (dout,), jnp.float32); ki += 1
            raw[f"mean{li}"] = 0.1 * jax.random.normal(keys[ki], (dout,), jnp.float32); ki += 1
            raw[f"var{li}"] = jax.random.uniform(keys[ki], (dout,), jnp.float32, 0.5, 1.5); ki += 1
        else:
            ki += 4
    return raw


def prepare_inference_params(raw, bn_eps=1e-5):
    """Fold eval-mode BatchNorm into the linears, transpose weights to (in, out),
    cast weights to bf16, keep biases in f32 as (1, out) row vectors."""
    p = {}
    for li in range(1, 6):
        w = raw[f"weight{li}"].T                    # (in, out) f32
        b = raw[f"bias{li}"]                        # (out,)    f32
        if li <= 4:
            s = raw[f"gamma{li}"] / jnp.sqrt(raw[f"var{li}"] + bn_eps)
            t = raw[f"beta{li}"] - raw[f"mean{li}"] * s
            w = w * s[None, :]                      # fold BN scale into output columns
            b = b * s + t                           # fold BN shift into the bias
        p[f"w{li}"] = w.astype(jnp.bfloat16)
        p[f"b{li}"] = b.reshape(1, -1).astype(jnp.float32)
    return p


def reference_forward(x, params):
    """Pure-JAX reference mirroring the kernel math (bf16 weights/activations, f32 accum)."""
    h = x.astype(jnp.bfloat16)
    for li in range(1, 5):
        y = jnp.dot(h, params[f"w{li}"], preferred_element_type=jnp.float32) + params[f"b{li}"]
        h = jnp.maximum(y, 0.0).astype(jnp.bfloat16)
    logits = jnp.dot(h, params["w5"], preferred_element_type=jnp.float32) + params["b5"]
    out = jax.nn.sigmoid(logits)
    if out.shape[-1] == 1:
        out = out[..., 0]
    return out


if __name__ == "__main__":
    # Small, lane-aligned shapes consistent with the module (defaults 1024/1024/512/256 shrunk).
    # B >> batch_tile so the multi-tile grid path is exercised (4 grid steps).
    B, N_FEATURES, N_CLASSES = 512, 256, 8
    H1_IN, H1_OUT, H2_OUT, H3_OUT = 256, 256, 128, 128
    BATCH_TILE = 128

    key = jax.random.PRNGKey(0)
    kx, kp = jax.random.split(key)
    x = jax.random.normal(kx, (B, N_FEATURES), jnp.float32)
    raw = make_params(kp, N_FEATURES, N_CLASSES, H1_IN, H1_OUT, H2_OUT, H3_OUT)
    params = prepare_inference_params(raw)

    fwd = jax.jit(functools.partial(four_hidden_layers_forward, batch_tile=BATCH_TILE))
    out = fwd(x, params)
    out = jax.block_until_ready(out)

    ref = reference_forward(x, params)
    assert out.shape == ref.shape, (out.shape, ref.shape)
    max_err = float(jnp.max(jnp.abs(out - ref)))
    assert max_err < 2e-3, f"mismatch vs reference, max abs err = {max_err}"

    print("KERNEL_OK")
</pallas_src>

<mosaic_0001>
module attributes {stable_mosaic.version = 11 : i64} {
  func.func @_mlp_kernel(%arg0: i32, %arg1: memref<128x256xbf16, #tpu.memory_space<vmem>>, %arg2: memref<256x256xbf16, #tpu.memory_space<vmem>>, %arg3: memref<1x256xf32, #tpu.memory_space<vmem>>, %arg4: memref<256x256xbf16, #tpu.memory_space<vmem>>, %arg5: memref<1x256xf32, #tpu.memory_space<vmem>>, %arg6: memref<256x128xbf16, #tpu.memory_space<vmem>>, %arg7: memref<1x128xf32, #tpu.memory_space<vmem>>, %arg8: memref<128x128xbf16, #tpu.memory_space<vmem>>, %arg9: memref<1x128xf32, #tpu.memory_space<vmem>>, %arg10: memref<128x128xbf16, #tpu.memory_space<vmem>>, %arg11: memref<1x128xf32, #tpu.memory_space<vmem>>, %arg12: memref<128x128xf32, #tpu.memory_space<vmem>>) attributes {dimension_semantics = [#tpu.dimension_semantics<parallel>], iteration_bounds = array<i64: 4>, scalar_prefetch = 0 : i64, scratch_operands = 0 : i64, tpu.core_type = #tpu.core_type<tc>, window_params = [{transform_indices = @transform_0, window_bounds = array<i64: 128, 256>}, {pipeline_mode = #tpu.pipeline_mode<synchronous>, transform_indices = @transform_1, window_bounds = array<i64: 256, 256>}, {pipeline_mode = #tpu.pipeline_mode<synchronous>, transform_indices = @transform_2, window_bounds = array<i64: 1, 256>}, {pipeline_mode = #tpu.pipeline_mode<synchronous>, transform_indices = @transform_3, window_bounds = array<i64: 256, 256>}, {pipeline_mode = #tpu.pipeline_mode<synchronous>, transform_indices = @transform_4, window_bounds = array<i64: 1, 256>}, {pipeline_mode = #tpu.pipeline_mode<synchronous>, transform_indices = @transform_5, window_bounds = array<i64: 256, 128>}, {pipeline_mode = #tpu.pipeline_mode<synchronous>, transform_indices = @transform_6, window_bounds = array<i64: 1, 128>}, {pipeline_mode = #tpu.pipeline_mode<synchronous>, transform_indices = @transform_7, window_bounds = array<i64: 128, 128>}, {pipeline_mode = #tpu.pipeline_mode<synchronous>, transform_indices = @transform_8, window_bounds = array<i64: 1, 128>}, {pipeline_mode = #tpu.pipeline_mode<synchronous>, transform_indices = @transform_9, window_bounds = array<i64: 128, 128>}, {pipeline_mode = #tpu.pipeline_mode<synchronous>, transform_indices = @transform_10, window_bounds = array<i64: 1, 128>}, {transform_indices = @transform_11, window_bounds = array<i64: 128, 128>}]} {
    %c0 = arith.constant 0 : index
    %c0_0 = arith.constant 0 : index
    %0 = vector.load %arg1[%c0, %c0_0] : memref<128x256xbf16, #tpu.memory_space<vmem>>, vector<128x256xbf16>
    %c0_1 = arith.constant 0 : index
    %c0_2 = arith.constant 0 : index
    %1 = vector.load %arg2[%c0_1, %c0_2] : memref<256x256xbf16, #tpu.memory_space<vmem>>, vector<256x256xbf16>
    %cst = arith.constant dense<0.000000e+00> : vector<128x256xf32>
    %2 = tpu.matmul %0, %1, %cst {dimension_numbers = #tpu.dot_dimension_numbers<[1], [0], [0], [1], [0, 0, 1, 1], [], []>} : vector<128x256xbf16>, vector<256x256xbf16>, vector<128x256xf32> -> vector<128x256xf32>
    %c0_3 = arith.constant 0 : index
    %c0_4 = arith.constant 0 : index
    %3 = vector.load %arg3[%c0_3, %c0_4] : memref<1x256xf32, #tpu.memory_space<vmem>>, vector<1x256xf32>
    %4 = vector.broadcast %3 : vector<1x256xf32> to vector<128x256xf32>
    %5 = arith.addf %2, %4 : vector<128x256xf32>
    %cst_5 = arith.constant 0.000000e+00 : f32
    %6 = vector.broadcast %cst_5 : f32 to vector<128x256xf32>
    %7 = arith.maximumf %5, %6 : vector<128x256xf32>
    %8 = arith.truncf %7 : vector<128x256xf32> to vector<128x256xbf16>
    %c0_6 = arith.constant 0 : index
    %c0_7 = arith.constant 0 : index
    %9 = vector.load %arg4[%c0_6, %c0_7] : memref<256x256xbf16, #tpu.memory_space<vmem>>, vector<256x256xbf16>
    %cst_8 = arith.constant dense<0.000000e+00> : vector<128x256xf32>
    %10 = tpu.matmul %8, %9, %cst_8 {dimension_numbers = #tpu.dot_dimension_numbers<[1], [0], [0], [1], [0, 0, 1, 1], [], []>} : vector<128x256xbf16>, vector<256x256xbf16>, vector<128x256xf32> -> vector<128x256xf32>
    %c0_9 = arith.constant 0 : index
    %c0_10 = arith.constant 0 : index
    %11 = vector.load %arg5[%c0_9, %c0_10] : memref<1x256xf32, #tpu.memory_space<vmem>>, vector<1x256xf32>
    %12 = vector.broadcast %11 : vector<1x256xf32> to vector<128x256xf32>
    %13 = arith.addf %10, %12 : vector<128x256xf32>
    %cst_11 = arith.constant 0.000000e+00 : f32
    %14 = vector.broadcast %cst_11 : f32 to vector<128x256xf32>
    %15 = arith.maximumf %13, %14 : vector<128x256xf32>
    %16 = arith.truncf %15 : vector<128x256xf32> to vector<128x256xbf16>
    %c0_12 = arith.constant 0 : index
    %c0_13 = arith.constant 0 : index
    %17 = vector.load %arg6[%c0_12, %c0_13] : memref<256x128xbf16, #tpu.memory_space<vmem>>, vector<256x128xbf16>
    %cst_14 = arith.constant dense<0.000000e+00> : vector<128x128xf32>
    %18 = tpu.matmul %16, %17, %cst_14 {dimension_numbers = #tpu.dot_dimension_numbers<[1], [0], [0], [1], [0, 0, 1, 1], [], []>} : vector<128x256xbf16>, vector<256x128xbf16>, vector<128x128xf32> -> vector<128x128xf32>
    %c0_15 = arith.constant 0 : index
    %c0_16 = arith.constant 0 : index
    %19 = vector.load %arg7[%c0_15, %c0_16] : memref<1x128xf32, #tpu.memory_space<vmem>>, vector<1x128xf32>
    %20 = vector.broadcast %19 : vector<1x128xf32> to vector<128x128xf32>
    %21 = arith.addf %18, %20 : vector<128x128xf32>
    %cst_17 = arith.constant 0.000000e+00 : f32
    %22 = vector.broadcast %cst_17 : f32 to vector<128x128xf32>
    %23 = arith.maximumf %21, %22 : vector<128x128xf32>
    %24 = arith.truncf %23 : vector<128x128xf32> to vector<128x128xbf16>
    %c0_18 = arith.constant 0 : index
    %c0_19 = arith.constant 0 : index
    %25 = vector.load %arg8[%c0_18, %c0_19] : memref<128x128xbf16, #tpu.memory_space<vmem>>, vector<128x128xbf16>
    %cst_20 = arith.constant dense<0.000000e+00> : vector<128x128xf32>
    %26 = tpu.matmul %24, %25, %cst_20 {dimension_numbers = #tpu.dot_dimension_numbers<[1], [0], [0], [1], [0, 0, 1, 1], [], []>} : vector<128x128xbf16>, vector<128x128xbf16>, vector<128x128xf32> -> vector<128x128xf32>
    %c0_21 = arith.constant 0 : index
    %c0_22 = arith.constant 0 : index
    %27 = vector.load %arg9[%c0_21, %c0_22] : memref<1x128xf32, #tpu.memory_space<vmem>>, vector<1x128xf32>
    %28 = vector.broadcast %27 : vector<1x128xf32> to vector<128x128xf32>
    %29 = arith.addf %26, %28 : vector<128x128xf32>
    %cst_23 = arith.constant 0.000000e+00 : f32
    %30 = vector.broadcast %cst_23 : f32 to vector<128x128xf32>
    %31 = arith.maximumf %29, %30 : vector<128x128xf32>
    %32 = arith.truncf %31 : vector<128x128xf32> to vector<128x128xbf16>
    %c0_24 = arith.constant 0 : index
    %c0_25 = arith.constant 0 : index
    %33 = vector.load %arg10[%c0_24, %c0_25] : memref<128x128xbf16, #tpu.memory_space<vmem>>, vector<128x128xbf16>
    %cst_26 = arith.constant dense<0.000000e+00> : vector<128x128xf32>
    %34 = tpu.matmul %32, %33, %cst_26 {dimension_numbers = #tpu.dot_dimension_numbers<[1], [0], [0], [1], [0, 0, 1, 1], [], []>} : vector<128x128xbf16>, vector<128x128xbf16>, vector<128x128xf32> -> vector<128x128xf32>
    %c0_27 = arith.constant 0 : index
    %c0_28 = arith.constant 0 : index
    %35 = vector.load %arg11[%c0_27, %c0_28] : memref<1x128xf32, #tpu.memory_space<vmem>>, vector<1x128xf32>
    %36 = vector.broadcast %35 : vector<1x128xf32> to vector<128x128xf32>
    %37 = arith.addf %34, %36 : vector<128x128xf32>
    %38 = arith.negf %37 : vector<128x128xf32>
    %39 = math.exp %38 : vector<128x128xf32>
    %cst_29 = arith.constant 1.000000e+00 : f32
    %40 = vector.broadcast %cst_29 : f32 to vector<128x128xf32>
    %41 = arith.addf %40, %39 : vector<128x128xf32>
    %42 = arith.divf %40, %41 : vector<128x128xf32>
    %c0_30 = arith.constant 0 : index
    %c0_31 = arith.constant 0 : index
    %43 = vector.load %arg12[%c0_30, %c0_31] : memref<128x128xf32, #tpu.memory_space<vmem>>, vector<128x128xf32>
    tpu.vector_store %arg12[%c0_30, %c0_31], %42 {strides = array<i32>} : memref<128x128xf32, #tpu.memory_space<vmem>>, vector<128x128xf32>,
    return
  }
  func.func @transform_0(%arg0: i32) -> (i32, i32) {
    %c0_i32 = arith.constant 0 : i32
    %c0_i32_0 = arith.constant 0 : i32
    return %arg0, %c0_i32 : i32, i32
  }
  func.func @transform_1(%arg0: i32) -> (i32, i32) {
    %c0_i32 = arith.constant 0 : i32
    %c0_i32_0 = arith.constant 0 : i32
    %c0_i32_1 = arith.constant 0 : i32
    return %c0_i32, %c0_i32_0 : i32, i32
  }
  func.func @transform_2(%arg0: i32) -> (i32, i32) {
    %c0_i32 = arith.constant 0 : i32
    %c0_i32_0 = arith.constant 0 : i32
    %c0_i32_1 = arith.constant 0 : i32
    return %c0_i32, %c0_i32_0 : i32, i32
  }
  func.func @transform_3(%arg0: i32) -> (i32, i32) {
    %c0_i32 = arith.constant 0 : i32
    %c0_i32_0 = arith.constant 0 : i32
    %c0_i32_1 = arith.constant 0 : i32
    return %c0_i32, %c0_i32_0 : i32, i32
  }
  func.func @transform_4(%arg0: i32) -> (i32, i32) {
    %c0_i32 = arith.constant 0 : i32
    %c0_i32_0 = arith.constant 0 : i32
    %c0_i32_1 = arith.constant 0 : i32
    return %c0_i32, %c0_i32_0 : i32, i32
  }
  func.func @transform_5(%arg0: i32) -> (i32, i32) {
    %c0_i32 = arith.constant 0 : i32
    %c0_i32_0 = arith.constant 0 : i32
    %c0_i32_1 = arith.constant 0 : i32
    return %c0_i32, %c0_i32_0 : i32, i32
  }
  func.func @transform_6(%arg0: i32) -> (i32, i32) {
    %c0_i32 = arith.constant 0 : i32
    %c0_i32_0 = arith.constant 0 : i32
    %c0_i32_1 = arith.constant 0 : i32
    return %c0_i32, %c0_i32_0 : i32, i32
  }
  func.func @transform_7(%arg0: i32) -> (i32, i32) {
    %c0_i32 = arith.constant 0 : i32
    %c0_i32_0 = arith.constant 0 : i32
    %c0_i32_1 = arith.constant 0 : i32
    return %c0_i32, %c0_i32_0 : i32, i32
  }
  func.func @transform_8(%arg0: i32) -> (i32, i32) {
    %c0_i32 = arith.constant 0 : i32
    %c0_i32_0 = arith.constant 0 : i32
    %c0_i32_1 = arith.constant 0 : i32
    return %c0_i32, %c0_i32_0 : i32, i32
  }
  func.func @transform_9(%arg0: i32) -> (i32, i32) {
    %c0_i32 = arith.constant 0 : i32
    %c0_i32_0 = arith.constant 0 : i32
    %c0_i32_1 = arith.constant 0 : i32
    return %c0_i32, %c0_i32_0 : i32, i32
  }
  func.func @transform_10(%arg0: i32) -> (i32, i32) {
    %c0_i32 = arith.constant 0 : i32
    %c0_i32_0 = arith.constant 0 : i32
    %c0_i32_1 = arith.constant 0 : i32
    return %c0_i32, %c0_i32_0 : i32, i32
  }
  func.func @transform_11(%arg0: i32) -> (i32, i32) {
    %c0_i32 = arith.constant 0 : i32
    %c0_i32_0 = arith.constant 0 : i32
    return %arg0, %c0_i32 : i32, i32
  }
}

</mosaic_0001>

<llo_original>
// kernel: four_hidden_layers_forward.1
$region0: #{four_hidden_layers_forward.1}
  #allocation0 [shape = 'u32[]', space=smem, size = 0x4, offset = 0x4, fixed_abs, tag = 'smem constant byte address 0x4 - core index']
  #allocation1 [shape = 'u32[144,128]{1,0:T(1,128)}', space=vmem, size = 0x12000, scoped, tag = 'internal scratch']
  %s0 = inlined_call_operand.vmem [shape: bf16[512,256], index: 0, kind: input, shape index: {}]
  %s1 = inlined_call_operand.vmem [shape: bf16[256,256], index: 1, kind: input, shape index: {}]
  %s2 = inlined_call_operand.vmem [shape: f32[1,256], index: 2, kind: input, shape index: {}]
  %s3 = inlined_call_operand.vmem [shape: bf16[256,256], index: 3, kind: input, shape index: {}]
  %s4 = inlined_call_operand.vmem [shape: f32[1,256], index: 4, kind: input, shape index: {}]
  %s5 = inlined_call_operand.vmem [shape: bf16[256,128], index: 5, kind: input, shape index: {}]
  %s6 = inlined_call_operand.vmem [shape: f32[1,128], index: 6, kind: input, shape index: {}]
  %s7 = inlined_call_operand.vmem [shape: bf16[128,128], index: 7, kind: input, shape index: {}]
  %s8 = inlined_call_operand.vmem [shape: f32[1,128], index: 8, kind: input, shape index: {}]
  %s9 = inlined_call_operand.vmem [shape: bf16[128,128], index: 9, kind: input, shape index: {}]
  %s10 = inlined_call_operand.vmem [shape: f32[1,128], index: 10, kind: input, shape index: {}]
  %s11 = inlined_call_operand.vmem [shape: f32[512,128], index: 11, kind: output, shape index: {}]
  %s12 = sld [smem:[#allocation0]]
  $region77: #{four_hidden_layers_forward.1} parent=0
    _
  %s14 = ssub.s32 1, %s12
  %s15 = scalar_select 0, %s14, %s12
  loop: start=0, step=1, limit=6
  $region2: #{four_hidden_layers_forward.1} parent=0 // loop_pre_header
    _
  $region3: #{four_hidden_layers_forward.1} parent=0 // loop_header
    %s17 = sphi 0, %s21
    %p18 = scmp.ge.s32.totalorder %s17, 6
    %s27 = sphi 0, %s29
    %s30 = sphi 0, %s27
    %s31 = sphi 0, %s30
    %s47 = sphi 0, %s31
    %s51 = sphi 0, %s51
    %s53 = sphi 0, %s51
    %s54 = sphi 0, %s53
    %s68 = sphi 0, %s54
    %s72 = sphi 0, %s72
    %s74 = sphi 0, %s72
    %s75 = sphi 0, %s74
    %s89 = sphi 0, %s75
    %s93 = sphi 0, %s93
    %s95 = sphi 0, %s93
    %s96 = sphi 0, %s95
    %s110 = sphi 0, %s96
    %s114 = sphi 0, %s114
    %s116 = sphi 0, %s114
    %s117 = sphi 0, %s116
    %s131 = sphi 0, %s117
    %s135 = sphi 0, %s135
    %s137 = sphi 0, %s135
    %s138 = sphi 0, %s137
    %s152 = sphi 0, %s138
    %s156 = sphi 0, %s156
    %s158 = sphi 0, %s156
    %s159 = sphi 0, %s158
    %s173 = sphi 0, %s159
    %s177 = sphi 0, %s177
    %s179 = sphi 0, %s177
    %s180 = sphi 0, %s179
    %s194 = sphi 0, %s180
    %s198 = sphi 0, %s198
    %s200 = sphi 0, %s198
    %s201 = sphi 0, %s200
    %s215 = sphi 0, %s201
    %s219 = sphi 0, %s219
    %s221 = sphi 0, %s219
    %s222 = sphi 0, %s221
    %s236 = sphi 0, %s222
    %s240 = sphi 0, %s240
    %s242 = sphi 0, %s240
    %s243 = sphi 0, %s242
    %s257 = sphi 0, %s243
    %s263 = sphi 0, %s265
    %s266 = sphi 0, %s263
    %s267 = sphi 0, %s266
    %s283 = sphi 0, %s267
  $region4: #{four_hidden_layers_forward.1} parent=0 // loop_header_branch
    %20 = sbr.rel (%p18) target = $region8
  $region5: #{four_hidden_layers_forward.1} parent=0 // loop_body
    %s22 = ssub.s32 %s17, 1
    %s23 = ssub.s32 %s17, 2
    %s24 = sadd.s32 %s17, 1
    %s25 = ssub.s32 %s17, %s24
    %p26 = scmp.eq.s32.totalorder %s25, 0
    %s28 = sadd.s32 %s27, 1
    %s29 = scalar_select %p26, %s27, %s28
    %p32 = pneg %p26
    %p33 = scmp.eq.s32.totalorder %s17, 3
    %p34 = por %p32, %p33
    %p35 = scmp.ne.s32.totalorder %s27, %s30
    %p36 = scmp.eq.s32.totalorder %s17, 0
    %p37 = por %p35, %p36
    %p38 = scmp.ne.s32.totalorder %s27, %s30
    %p39 = scmp.eq.s32.totalorder %s22, 3
    %p40 = por %p38, %p39
    %p41 = scmp.ne.s32.totalorder %s30, %s31
    %p42 = scmp.eq.s32.totalorder %s22, 0
    %p43 = por %p41, %p42
    %p44 = scmp.ne.s32.totalorder %s30, %s31
    %p45 = scmp.eq.s32.totalorder %s23, 3
    %p46 = por %p44, %p45
    %p48 = scmp.ne.s32.totalorder %s31, %s47
    %p49 = scmp.eq.s32.totalorder %s23, 0
    %p50 = por %p48, %p49
    %s52 = sadd.s32 %s51, 1
    %p55 = scmp.eq.s32.totalorder %s17, 3
    %p56 = scmp.ne.s32.totalorder %s51, %s53
    %p57 = scmp.eq.s32.totalorder %s17, 0
    %p58 = por %p56, %p57
    %p59 = scmp.ne.s32.totalorder %s51, %s53
    %p60 = scmp.eq.s32.totalorder %s22, 3
    %p61 = por %p59, %p60
    %p62 = scmp.ne.s32.totalorder %s53, %s54
    %p63 = scmp.eq.s32.totalorder %s22, 0
    %p64 = por %p62, %p63
    %p65 = scmp.ne.s32.totalorder %s53, %s54
    %p66 = scmp.eq.s32.totalorder %s23, 3
    %p67 = por %p65, %p66
    %p69 = scmp.ne.s32.totalorder %s54, %s68
    %p70 = scmp.eq.s32.totalorder %s23, 0
    %p71 = por %p69, %p70
    %s73 = sadd.s32 %s72, 1
    %p76 = scmp.eq.s32.totalorder %s17, 3
    %p77 = scmp.ne.s32.totalorder %s72, %s74
    %p78 = scmp.eq.s32.totalorder %s17, 0
    %p79 = por %p77, %p78
    %p80 = scmp.ne.s32.totalorder %s72, %s74
    %p81 = scmp.eq.s32.totalorder %s22, 3
    %p82 = por %p80, %p81
    %p83 = scmp.ne.s32.totalorder %s74, %s75
    %p84 = scmp.eq.s32.totalorder %s22, 0
    %p85 = por %p83, %p84
    %p86 = scmp.ne.s32.totalorder %s74, %s75
    %p87 = scmp.eq.s32.totalorder %s23, 3
    %p88 = por %p86, %p87
    %p90 = scmp.ne.s32.totalorder %s75, %s89
    %p91 = scmp.eq.s32.totalorder %s23, 0
    %p92 = por %p90, %p91
    %s94 = sadd.s32 %s93, 1
    %p97 = scmp.eq.s32.totalorder %s17, 3
    %p98 = scmp.ne.s32.totalorder %s93, %s95
    %p99 = scmp.eq.s32.totalorder %s17, 0
    %p100 = por %p98, %p99
    %p101 = scmp.ne.s32.totalorder %s93, %s95
    %p102 = scmp.eq.s32.totalorder %s22, 3
    %p103 = por %p101, %p102
    %p104 = scmp.ne.s32.totalorder %s95, %s96
    %p105 = scmp.eq.s32.totalorder %s22, 0
    %p106 = por %p104, %p105
    %p107 = scmp.ne.s32.totalorder %s95, %s96
    %p108 = scmp.eq.s32.totalorder %s23, 3
    %p109 = por %p107, %p108
    %p111 = scmp.ne.s32.totalorder %s96, %s110
    %p112 = scmp.eq.s32.totalorder %s23, 0
    %p113 = por %p111, %p112
    %s115 = sadd.s32 %s114, 1
    %p118 = scmp.eq.s32.totalorder %s17, 3
    %p119 = scmp.ne.s32.totalorder %s114, %s116
    %p120 = scmp.eq.s32.totalorder %s17, 0
    %p121 = por %p119, %p120
    %p122 = scmp.ne.s32.totalorder %s114, %s116
    %p123 = scmp.eq.s32.totalorder %s22, 3
    %p124 = por %p122, %p123
    %p125 = scmp.ne.s32.totalorder %s116, %s117
    %p126 = scmp.eq.s32.totalorder %s22, 0
    %p127 = por %p125, %p126
    %p128 = scmp.ne.s32.totalorder %s116, %s117
    %p129 = scmp.eq.s32.totalorder %s23, 3
    %p130 = por %p128, %p129
    %p132 = scmp.ne.s32.totalorder %s117, %s131
    %p133 = scmp.eq.s32.totalorder %s23, 0
    %p134 = por %p132, %p133
    %s136 = sadd.s32 %s135, 1
    %p139 = scmp.eq.s32.totalorder %s17, 3
    %p140 = scmp.ne.s32.totalorder %s135, %s137
    %p141 = scmp.eq.s32.totalorder %s17, 0
    %p142 = por %p140, %p141
    %p143 = scmp.ne.s32.totalorder %s135, %s137
    %p144 = scmp.eq.s32.totalorder %s22, 3
    %p145 = por %p143, %p144
    %p146 = scmp.ne.s32.totalorder %s137, %s138
    %p147 = scmp.eq.s32.totalorder %s22, 0
    %p148 = por %p146, %p147
    %p149 = scmp.ne.s32.totalorder %s137, %s138
    %p150 = scmp.eq.s32.totalorder %s23, 3
    %p151 = por %p149, %p150
    %p153 = scmp.ne.s32.totalorder %s138, %s152
    %p154 = scmp.eq.s32.totalorder %s23, 0
    %p155 = por %p153, %p154
    %s157 = sadd.s32 %s156, 1
    %p160 = scmp.eq.s32.totalorder %s17, 3
    %p161 = scmp.ne.s32.totalorder %s156, %s158
    %p162 = scmp.eq.s32.totalorder %s17, 0
    %p163 = por %p161, %p162
    %p164 = scmp.ne.s32.totalorder %s156, %s158
    %p165 = scmp.eq.s32.totalorder %s22, 3
    %p166 = por %p164, %p165
    %p167 = scmp.ne.s32.totalorder %s158, %s159
    %p168 = scmp.eq.s32.totalorder %s22, 0
    %p169 = por %p167, %p168
    %p170 = scmp.ne.s32.totalorder %s158, %s159
    %p171 = scmp.eq.s32.totalorder %s23, 3
    %p172 = por %p170, %p171
    %p174 = scmp.ne.s32.totalorder %s159, %s173
    %p175 = scmp.eq.s32.totalorder %s23, 0
    %p176 = por %p174, %p175
    %s178 = sadd.s32 %s177, 1
    %p181 = scmp.eq.s32.totalorder %s17, 3
    %p182 = scmp.ne.s32.totalorder %s177, %s179
    %p183 = scmp.eq.s32.totalorder %s17, 0
    %p184 = por %p182, %p183
    %p185 = scmp.ne.s32.totalorder %s177, %s179
    %p186 = scmp.eq.s32.totalorder %s22, 3
    %p187 = por %p185, %p186
    %p188 = scmp.ne.s32.totalorder %s179, %s180
    %p189 = scmp.eq.s32.totalorder %s22, 0
    %p190 = por %p188, %p189
    %p191 = scmp.ne.s32.totalorder %s179, %s180
    %p192 = scmp.eq.s32.totalorder %s23, 3
    %p193 = por %p191, %p192
    %p195 = scmp.ne.s32.totalorder %s180, %s194
    %p196 = scmp.eq.s32.totalorder %s23, 0
    %p197 = por %p195, %p196
    %s199 = sadd.s32 %s198, 1
    %p202 = scmp.eq.s32.totalorder %s17, 3
    %p203 = scmp.ne.s32.totalorder %s198, %s200
    %p204 = scmp.eq.s32.totalorder %s17, 0
    %p205 = por %p203, %p204
    %p206 = scmp.ne.s32.totalorder %s198, %s200
    %p207 = scmp.eq.s32.totalorder %s22, 3
    %p208 = por %p206, %p207
    %p209 = scmp.ne.s32.totalorder %s200, %s201
    %p210 = scmp.eq.s32.totalorder %s22, 0
    %p211 = por %p209, %p210
    %p212 = scmp.ne.s32.totalorder %s200, %s201
    %p213 = scmp.eq.s32.totalorder %s23, 3
    %p214 = por %p212, %p213
    %p216 = scmp.ne.s32.totalorder %s201, %s215
    %p217 = scmp.eq.s32.totalorder %s23, 0
    %p218 = por %p216, %p217
    %s220 = sadd.s32 %s219, 1
    %p223 = scmp.eq.s32.totalorder %s17, 3
    %p224 = scmp.ne.s32.totalorder %s219, %s221
    %p225 = scmp.eq.s32.totalorder %s17, 0
    %p226 = por %p224, %p225
    %p227 = scmp.ne.s32.totalorder %s219, %s221
    %p228 = scmp.eq.s32.totalorder %s22, 3
    %p229 = por %p227, %p228
    %p230 = scmp.ne.s32.totalorder %s221, %s222
    %p231 = scmp.eq.s32.totalorder %s22, 0
    %p232 = por %p230, %p231
    %p233 = scmp.ne.s32.totalorder %s221, %s222
    %p234 = scmp.eq.s32.totalorder %s23, 3
    %p235 = por %p233, %p234
    %p237 = scmp.ne.s32.totalorder %s222, %s236
    %p238 = scmp.eq.s32.totalorder %s23, 0
    %p239 = por %p237, %p238
    %s241 = sadd.s32 %s240, 1
    %p244 = scmp.eq.s32.totalorder %s17, 3
    %p245 = scmp.ne.s32.totalorder %s240, %s242
    %p246 = scmp.eq.s32.totalorder %s17, 0
    %p247 = por %p245, %p246
    %p248 = scmp.ne.s32.totalorder %s240, %s242
    %p249 = scmp.eq.s32.totalorder %s22, 3
    %p250 = por %p248, %p249
    %p251 = scmp.ne.s32.totalorder %s242, %s243
    %p252 = scmp.eq.s32.totalorder %s22, 0
    %p253 = por %p251, %p252
    %p254 = scmp.ne.s32.totalorder %s242, %s243
    %p255 = scmp.eq.s32.totalorder %s23, 3
    %p256 = por %p254, %p255
    %p258 = scmp.ne.s32.totalorder %s243, %s257
    %p259 = scmp.eq.s32.totalorder %s23, 0
    %p260 = por %p258, %p259
    %s261 = ssub.s32 %s17, %s24
    %p262 = scmp.eq.s32.totalorder %s261, 0
    %s264 = sadd.s32 %s263, 1
    %s265 = scalar_select %p262, %s263, %s264
    %p268 = pneg %p262
    %p269 = scmp.eq.s32.totalorder %s17, 3
    %p270 = por %p268, %p269
    %p271 = scmp.ne.s32.totalorder %s263, %s266
    %p272 = scmp.eq.s32.totalorder %s17, 0
    %p273 = por %p271, %p272
    %p274 = scmp.ne.s32.totalorder %s263, %s266
    %p275 = scmp.eq.s32.totalorder %s22, 3
    %p276 = por %p274, %p275
    %p277 = scmp.ne.s32.totalorder %s266, %s267
    %p278 = scmp.eq.s32.totalorder %s22, 0
    %p279 = por %p277, %p278
    %p280 = scmp.ne.s32.totalorder %s266, %s267
    %p281 = scmp.eq.s32.totalorder %s23, 3
    %p282 = por %p280, %p281
    %p284 = scmp.ne.s32.totalorder %s267, %s283
    %p285 = scmp.eq.s32.totalorder %s23, 0
    %p286 = por %p284, %p285
    %p287 = scmp.le.s32.totalorder 1, %s17
    %p288 = scmp.lt.s32.totalorder %s17, 5
    %p289 = pnand %p287, %p288
    %p290 = pneg %p289
    // Predicated region
    $region9: #{four_hidden_layers_forward.1} parent=5 // pred_check
      _
    $region10: #{four_hidden_layers_forward.1} parent=5 // pred_check_branch
      %292 = sbr.rel (%p289) target = $region12
    $region11: #{four_hidden_layers_forward.1} parent=5 // pred_region
      %s293 = ssub.s32 %s17, 1
      // Predicated region
      $region13: #{four_hidden_layers_forward.1} parent=11 // pred_check
        %p294 = pneg %p64
      $region14: #{four_hidden_layers_forward.1} parent=11 // pred_check_branch
        %296 = sbr.rel (%p294) target = $region16
      $region15: #{four_hidden_layers_forward.1} parent=11 // pred_region
        _
      $region16: #{four_hidden_layers_forward.1} parent=11 // pred_fallthru
        _
      // Predicated region
      $region17: #{four_hidden_layers_forward.1} parent=11 // pred_check
        %p297 = pneg %p85
      $region18: #{four_hidden_layers_forward.1} parent=11 // pred_check_branch
        %299 = sbr.rel (%p297) target = $region20
      $region19: #{four_hidden_layers_forward.1} parent=11 // pred_region
        _
      $region20: #{four_hidden_layers_forward.1} parent=11 // pred_fallthru
        _
      // Predicated region
      $region21: #{four_hidden_layers_forward.1} parent=11 // pred_check
        %p300 = pneg %p106
      $region22: #{four_hidden_layers_forward.1} parent=11 // pred_check_branch
        %302 = sbr.rel (%p300) target = $region24
      $region23: #{four_hidden_layers_forward.1} parent=11 // pred_region
        _
      $region24: #{four_hidden_layers_forward.1} parent=11 // pred_fallthru
        _
      // Predicated region
      $region25: #{four_hidden_layers_forward.1} parent=11 // pred_check
        %p303 = pneg %p127
      $region26: #{four_hidden_layers_forward.1} parent=11 // pred_check_branch
        %305 = sbr.rel (%p303) target = $region28
      $region27: #{four_hidden_layers_forward.1} parent=11 // pred_region
        _
      $region28: #{four_hidden_layers_forward.1} parent=11 // pred_fallthru
        _
      // Predicated region
      $region29: #{four_hidden_layers_forward.1} parent=11 // pred_check
        %p306 = pneg %p148
      $region30: #{four_hidden_layers_forward.1} parent=11 // pred_check_branch
        %308 = sbr.rel (%p306) target = $region32
      $region31: #{four_hidden_layers_forward.1} parent=11 // pred_region
        _
      $region32: #{four_hidden_layers_forward.1} parent=11 // pred_fallthru
        _
      // Predicated region
      $region33: #{four_hidden_layers_forward.1} parent=11 // pred_check
        %p309 = pneg %p169
      $region34: #{four_hidden_layers_forward.1} parent=11 // pred_check_branch
        %311 = sbr.rel (%p309) target = $region36
      $region35: #{four_hidden_layers_forward.1} parent=11 // pred_region
        _
      $region36: #{four_hidden_layers_forward.1} parent=11 // pred_fallthru
        _
      // Predicated region
      $region37: #{four_hidden_layers_forward.1} parent=11 // pred_check
        %p312 = pneg %p190
      $region38: #{four_hidden_layers_forward.1} parent=11 // pred_check_branch
        %314 = sbr.rel (%p312) target = $region40
      $region39: #{four_hidden_layers_forward.1} parent=11 // pred_region
        _
      $region40: #{four_hidden_layers_forward.1} parent=11 // pred_fallthru
        _
      // Predicated region
      $region41: #{four_hidden_layers_forward.1} parent=11 // pred_check
        %p315 = pneg %p211
      $region42: #{four_hidden_layers_forward.1} parent=11 // pred_check_branch
        %317 = sbr.rel (%p315) target = $region44
      $region43: #{four_hidden_layers_forward.1} parent=11 // pred_region
        _
      $region44: #{four_hidden_layers_forward.1} parent=11 // pred_fallthru
        _
      // Predicated region
      $region45: #{four_hidden_layers_forward.1} parent=11 // pred_check
        %p318 = pneg %p232
      $region46: #{four_hidden_layers_forward.1} parent=11 // pred_check_branch
        %320 = sbr.rel (%p318) target = $region48
      $region47: #{four_hidden_layers_forward.1} parent=11 // pred_region
        _
      $region48: #{four_hidden_layers_forward.1} parent=11 // pred_fallthru
        _
      // Predicated region
      $region49: #{four_hidden_layers_forward.1} parent=11 // pred_check
        %p321 = pneg %p253
      $region50: #{four_hidden_layers_forward.1} parent=11 // pred_check_branch
        %323 = sbr.rel (%p321) target = $region52
      $region51: #{four_hidden_layers_forward.1} parent=11 // pred_region
        _
      $region52: #{four_hidden_layers_forward.1} parent=11 // pred_fallthru
        _
    $region12: #{four_hidden_layers_forward.1} parent=5 // pred_fallthru
      _
    %p324 = scmp.lt.s32.totalorder %s17, 4
    // Predicated region
    $region53: #{four_hidden_layers_forward.1} parent=5 // pred_check
      %p325 = pneg %p324
    $region54: #{four_hidden_layers_forward.1} parent=5 // pred_check_branch
      %327 = sbr.rel (%p325) target = $region56
    $region55: #{four_hidden_layers_forward.1} parent=5 // pred_region
      // Predicated region
      $region57: #{four_hidden_layers_forward.1} parent=55 // pred_check
        %p328 = pneg %p37
      $region58: #{four_hidden_layers_forward.1} parent=55 // pred_check_branch
        %330 = sbr.rel (%p328) target = $region60
      $region59: #{four_hidden_layers_forward.1} parent=55 // pred_region
        %s331 = smul.u32 16, %s17
        %p332 = scmp.lt.s32.totalorder %s331, 63
        %s333 = scalar_select %p332, %s331, 63
        %s334 = smul.addr %s333, 2
        %s335 = smul.addr %s334, 4
        %s336 = scalar_lea.vmem %s0, %s335
        %s337 = smul.u32 16, %s17
      $region60: #{four_hidden_layers_forward.1} parent=55 // pred_fallthru
        _
    $region56: #{four_hidden_layers_forward.1} parent=5 // pred_fallthru
      _
    %p338 = scmp.le.s32.totalorder 1, %s17
    %p339 = scmp.lt.s32.totalorder %s17, 5
    %p340 = pnand %p338, %p339
    %p341 = pneg %p340
    // Predicated region
    $region61: #{four_hidden_layers_forward.1} parent=5 // pred_check
      _
    $region62: #{four_hidden_layers_forward.1} parent=5 // pred_check_branch
      %343 = sbr.rel (%p340) target = $region64
    $region63: #{four_hidden_layers_forward.1} parent=5 // pred_region
      %s344 = ssub.s32 %s17, 1
      %s345 = smul.u32 16, %s22
      %p346 = scmp.lt.s32.totalorder %s345, 63
      %s347 = scalar_select %p346, %s345, 63
      %s348 = smul.addr %s347, 2
      %s349 = smul.addr %s348, 4
      %s350 = scalar_lea.vmem %s0, %s349
      %p351 = pneg %p43
      %p352 = pneg %p40
      %p353 = pneg %p64
      %p354 = pneg %p61
      %p355 = pneg %p85
      %p356 = pneg %p82
      %p357 = pneg %p106
      %p358 = pneg %p103
      %p359 = pneg %p127
      %p360 = pneg %p124
      %p361 = pneg %p148
      %p362 = pneg %p145
      %p363 = pneg %p169
      %p364 = pneg %p166
      %p365 = pneg %p190
      %p366 = pneg %p187
      %p367 = pneg %p211
      %p368 = pneg %p208
      %p369 = pneg %p232
      %p370 = pneg %p229
      %p371 = pneg %p253
      %p372 = pneg %p250
      %p373 = pneg %p279
      %p374 = pneg %p276
      %s375 = smul.u32 16, %s22
      %p376 = scmp.lt.s32.totalorder %s375, 63
      %s377 = scalar_select %p376, %s375, 63
      %s378 = smul.addr %s377, 8
      %s379 = scalar_lea.vmem %s11, %s378
      %s380 = smul.u32 16, %s22
      %p381 = scmp.lt.s32.totalorder %s380, 63
      %s382 = scalar_select %p381, %s380, 63
      %s383 = smul.addr %s382, 2
      %s384 = smul.addr %s383, 4
      %s385 = scalar_lea.vmem %s0, %s384
      %s386 = smul.u32 16, %s22
      %s387 = smul.u32 16, %s22
      %p388 = scmp.lt.s32.totalorder %s387, 63
      %s389 = scalar_select %p388, %s387, 63
      %s390 = smul.addr %s389, 8
      %s391 = scalar_lea.vmem %s11, %s390
      %s392 = smul.u32 16, %s22
      %v394 = vld [vmem:[%s385] sm:$0xff]
      %v395 = vld [vmem:[%s385 + $0x8] sm:$0xff]
      %v396 = vld [vmem:[%s385 + $0x10] sm:$0xff]
      %v397 = vld [vmem:[%s385 + $0x18] sm:$0xff]
      %v398 = vld [vmem:[%s385 + $0x20] sm:$0xff]
      %v399 = vld [vmem:[%s385 + $0x28] sm:$0xff]
      %v400 = vld [vmem:[%s385 + $0x30] sm:$0xff]
      %v401 = vld [vmem:[%s385 + $0x38] sm:$0xff]
      %v402 = vld [vmem:[%s385 + $0x40] sm:$0xff]
      %v403 = vld [vmem:[%s385 + $0x48] sm:$0xff]
      %v404 = vld [vmem:[%s385 + $0x50] sm:$0xff]
      %v405 = vld [vmem:[%s385 + $0x58] sm:$0xff]
      %v406 = vld [vmem:[%s385 + $0x60] sm:$0xff]
      %v407 = vld [vmem:[%s385 + $0x68] sm:$0xff]
      %v408 = vld [vmem:[%s385 + $0x70] sm:$0xff]
      %v409 = vld [vmem:[%s385 + $0x78] sm:$0xff]
      %v410 = vld [vmem:[%s1] sm:$0xff]
      %v411 = vld [vmem:[%s1 + $0x8] sm:$0xff]
      %v412 = vld [vmem:[%s1 + $0x10] sm:$0xff]
      %v413 = vld [vmem:[%s1 + $0x18] sm:$0xff]
      %v414 = vld [vmem:[%s1 + $0x20] sm:$0xff]
      %v415 = vld [vmem:[%s1 + $0x28] sm:$0xff]
      %v416 = vld [vmem:[%s1 + $0x30] sm:$0xff]
      %v417 = vld [vmem:[%s1 + $0x38] sm:$0xff]
      %v418 = vld [vmem:[%s1 + $0x40] sm:$0xff]
      %v419 = vld [vmem:[%s1 + $0x48] sm:$0xff]
      %v420 = vld [vmem:[%s1 + $0x50] sm:$0xff]
      %v421 = vld [vmem:[%s1 + $0x58] sm:$0xff]
      %v422 = vld [vmem:[%s1 + $0x60] sm:$0xff]
      %v423 = vld [vmem:[%s1 + $0x68] sm:$0xff]
      %v424 = vld [vmem:[%s1 + $0x70] sm:$0xff]
      %v425 = vld [vmem:[%s1 + $0x78] sm:$0xff]
      %v426 = vld [vmem:[%s1 + $0x80] sm:$0xff]
      %v427 = vld [vmem:[%s1 + $0x88] sm:$0xff]
      %v428 = vld [vmem:[%s1 + $0x90] sm:$0xff]
      %v429 = vld [vmem:[%s1 + $0x98] sm:$0xff]
      %v430 = vld [vmem:[%s1 + $0xa0] sm:$0xff]
      %v431 = vld [vmem:[%s1 + $0xa8] sm:$0xff]
      %v432 = vld [vmem:[%s1 + $0xb0] sm:$0xff]
      %v433 = vld [vmem:[%s1 + $0xb8] sm:$0xff]
      %v434 = vld [vmem:[%s1 + $0xc0] sm:$0xff]
      %v435 = vld [vmem:[%s1 + $0xc8] sm:$0xff]
      %v436 = vld [vmem:[%s1 + $0xd0] sm:$0xff]
      %v437 = vld [vmem:[%s1 + $0xd8] sm:$0xff]
      %v438 = vld [vmem:[%s1 + $0xe0] sm:$0xff]
      %v439 = vld [vmem:[%s1 + $0xe8] sm:$0xff]
      %v440 = vld [vmem:[%s1 + $0xf0] sm:$0xff]
      %v441 = vld [vmem:[%s1 + $0xf8] sm:$0xff]
      %v442 = vld [vmem:[%s2] sm:$0x3]
      %v444 = vlaneseq
      %v445 = vshrl.u32 %v444, 7
      %v446 = vsub.s32 0, %v445
      %v447 = vrot.slane %v442, %v446
      %v448 = vlaneseq
      %v449 = vshrl.u32 %v448, 7
      %v450 = vsub.s32 1, %v449
      %v451 = vrot.slane %v442, %v450
      %v470 = vunpack.c.l.b16 %v394
      %v471 = vunpack.c.h.b16 %v394
      %v472 = vunpack.c.l.b16 %v395
      %v473 = vunpack.c.h.b16 %v395
      %v474 = vunpack.c.l.b16 %v396
      %v475 = vunpack.c.h.b16 %v396
      %v476 = vunpack.c.l.b16 %v397
      %v477 = vunpack.c.h.b16 %v397
      %v478 = vunpack.c.l.b16 %v398
      %v479 = vunpack.c.h.b16 %v398
      %v480 = vunpack.c.l.b16 %v399
      %v481 = vunpack.c.h.b16 %v399
      %v482 = vunpack.c.l.b16 %v400
      %v483 = vunpack.c.h.b16 %v400
      %v484 = vunpack.c.l.b16 %v401
      %v485 = vunpack.c.h.b16 %v401
      %v486 = vunpack.c.l.b16 %v402
      %v487 = vunpack.c.h.b16 %v402
      %v488 = vunpack.c.l.b16 %v403
      %v489 = vunpack.c.h.b16 %v403
      %v490 = vunpack.c.l.b16 %v404
      %v491 = vunpack.c.h.b16 %v404
      %v492 = vunpack.c.l.b16 %v405
      %v493 = vunpack.c.h.b16 %v405
      %v494 = vunpack.c.l.b16 %v406
      %v495 = vunpack.c.h.b16 %v406
      %v496 = vunpack.c.l.b16 %v407
      %v497 = vunpack.c.h.b16 %v407
      %v498 = vunpack.c.l.b16 %v408
      %v499 = vunpack.c.h.b16 %v408
      %v500 = vunpack.c.l.b16 %v409
      %v501 = vunpack.c.h.b16 %v409
      %v502 = vpack.c.b16 %v472, %v470
      %v503 = vpack.c.b16 %v473, %v471
      %v504 = vpack.c.b16 %v476, %v474
      %v505 = vpack.c.b16 %v477, %v475
      %v506 = vpack.c.b16 %v480, %v478
      %v507 = vpack.c.b16 %v481, %v479
      %v508 = vpack.c.b16 %v484, %v482
      %v509 = vpack.c.b16 %v485, %v483
      %v510 = vpack.c.b16 %v488, %v486
      %v511 = vpack.c.b16 %v489, %v487
      %v512 = vpack.c.b16 %v492, %v490
      %v513 = vpack.c.b16 %v493, %v491
      %v514 = vpack.c.b16 %v496, %v494
      %v515 = vpack.c.b16 %v497, %v495
      %v516 = vpack.c.b16 %v500, %v498
      %v517 = vpack.c.b16 %v501, %v499
      %v566 = vunpack.c.l.b16 %v410
      %v567 = vunpack.c.h.b16 %v410
      %v568 = vunpack.c.l.b16 %v411
      %v569 = vunpack.c.h.b16 %v411
      %v570 = vunpack.c.l.b16 %v412
      %v571 = vunpack.c.h.b16 %v412
      %v572 = vunpack.c.l.b16 %v413
      %v573 = vunpack.c.h.b16 %v413
      %v574 = vunpack.c.l.b16 %v414
      %v575 = vunpack.c.h.b16 %v414
      %v576 = vunpack.c.l.b16 %v415
      %v577 = vunpack.c.h.b16 %v415
      %v578 = vunpack.c.l.b16 %v416
      %v579 = vunpack.c.h.b16 %v416
      %v580 = vunpack.c.l.b16 %v417
      %v581 = vunpack.c.h.b16 %v417
      %v582 = vunpack.c.l.b16 %v418
      %v583 = vunpack.c.h.b16 %v418
      %v584 = vunpack.c.l.b16 %v419
      %v585 = vunpack.c.h.b16 %v419
      %v586 = vunpack.c.l.b16 %v420
      %v587 = vunpack.c.h.b16 %v420
      %v588 = vunpack.c.l.b16 %v421
      %v589 = vunpack.c.h.b16 %v421
      %v590 = vunpack.c.l.b16 %v422
      %v591 = vunpack.c.h.b16 %v422
      %v592 = vunpack.c.l.b16 %v423
      %v593 = vunpack.c.h.b16 %v423
      %v594 = vunpack.c.l.b16 %v424
      %v595 = vunpack.c.h.b16 %v424
      %v596 = vunpack.c.l.b16 %v425
      %v597 = vunpack.c.h.b16 %v425
      %v598 = vunpack.c.l.b16 %v426
      %v599 = vunpack.c.h.b16 %v426
      %v600 = vunpack.c.l.b16 %v427
      %v601 = vunpack.c.h.b16 %v427
      %v602 = vunpack.c.l.b16 %v428
      %v603 = vunpack.c.h.b16 %v428
      %v604 = vunpack.c.l.b16 %v429
      %v605 = vunpack.c.h.b16 %v429
      %v606 = vunpack.c.l.b16 %v430
      %v607 = vunpack.c.h.b16 %v430
      %v608 = vunpack.c.l.b16 %v431
      %v609 = vunpack.c.h.b16 %v431
      %v610 = vunpack.c.l.b16 %v432
      %v611 = vunpack.c.h.b16 %v432
      %v612 = vunpack.c.l.b16 %v433
      %v613 = vunpack.c.h.b16 %v433
      %v614 = vunpack.c.l.b16 %v434
      %v615 = vunpack.c.h.b16 %v434
      %v616 = vunpack.c.l.b16 %v435
      %v617 = vunpack.c.h.b16 %v435
      %v618 = vunpack.c.l.b16 %v436
      %v619 = vunpack.c.h.b16 %v436
      %v620 = vunpack.c.l.b16 %v437
      %v621 = vunpack.c.h.b16 %v437
      %v622 = vunpack.c.l.b16 %v438
      %v623 = vunpack.c.h.b16 %v438
      %v624 = vunpack.c.l.b16 %v439
      %v625 = vunpack.c.h.b16 %v439
      %v626 = vunpack.c.l.b16 %v440
      %v627 = vunpack.c.h.b16 %v440
      %v628 = vunpack.c.l.b16 %v441
      %v629 = vunpack.c.h.b16 %v441
      %v630 = vpack.c.b16 %v568, %v566
      %v631 = vpack.c.b16 %v569, %v567
      %v632 = vpack.c.b16 %v572, %v570
      %v633 = vpack.c.b16 %v573, %v571
      %v634 = vpack.c.b16 %v576, %v574
      %v635 = vpack.c.b16 %v577, %v575
      %v636 = vpack.c.b16 %v580, %v578
      %v637 = vpack.c.b16 %v581, %v579
      %v638 = vpack.c.b16 %v584, %v582
      %v639 = vpack.c.b16 %v585, %v583
      %v640 = vpack.c.b16 %v588, %v586
      %v641 = vpack.c.b16 %v589, %v587
      %v642 = vpack.c.b16 %v592, %v590
      %v643 = vpack.c.b16 %v593, %v591
      %v644 = vpack.c.b16 %v596, %v594
      %v645 = vpack.c.b16 %v597, %v595
      %v646 = vpack.c.b16 %v600, %v598
      %v647 = vpack.c.b16 %v601, %v599
      %v648 = vpack.c.b16 %v604, %v602
      %v649 = vpack.c.b16 %v605, %v603
      %v650 = vpack.c.b16 %v608, %v606
      %v651 = vpack.c.b16 %v609, %v607
      %v652 = vpack.c.b16 %v612, %v610
      %v653 = vpack.c.b16 %v613, %v611
      %v654 = vpack.c.b16 %v616, %v614
      %v655 = vpack.c.b16 %v617, %v615
      %v656 = vpack.c.b16 %v620, %v618
      %v657 = vpack.c.b16 %v621, %v619
      %v658 = vpack.c.b16 %v624, %v622
      %v659 = vpack.c.b16 %v625, %v623
      %v660 = vpack.c.b16 %v628, %v626
      %v661 = vpack.c.b16 %v629, %v627
      %694 = vmatprep.subr.bf16.mxu0 %v631
      %695 = vmatpush1.bf16.msra.mxu0 %v630
      %696 = vmatprep.subr.bf16.mxu0 %v633
      %697 = vmatpush1.bf16.msra.mxu0 %v632
      %698 = vmatprep.subr.bf16.mxu0 %v635
      %699 = vmatpush1.bf16.msra.mxu0 %v634
      %700 = vmatprep.subr.bf16.mxu0 %v637
      %701 = vmatpush1.bf16.msra.mxu0 %v636
      %702 = vmatprep.subr.bf16.mxu0 %v639
      %703 = vmatpush1.bf16.msra.mxu0 %v638
      %704 = vmatprep.subr.bf16.mxu0 %v641
      %705 = vmatpush1.bf16.msra.mxu0 %v640
      %706 = vmatprep.subr.bf16.mxu0 %v643
      %707 = vmatpush1.bf16.msra.mxu0 %v642
      %708 = vmatprep.subr.bf16.mxu0 %v645
      %709 = vmatpush1.bf16.msra.mxu0 %v644
      %710 = vmatprep.subr.bf16.mxu0 %v647
      %711 = vmatpush1.bf16.msra.mxu0 %v646
      %712 = vmatprep.subr.bf16.mxu0 %v649
      %713 = vmatpush1.bf16.msra.mxu0 %v648
      %714 = vmatprep.subr.bf16.mxu0 %v651
      %715 = vmatpush1.bf16.msra.mxu0 %v650
      %716 = vmatprep.subr.bf16.mxu0 %v653
      %717 = vmatpush1.bf16.msra.mxu0 %v652
      %718 = vmatprep.subr.bf16.mxu0 %v655
      %719 = vmatpush1.bf16.msra.mxu0 %v654
      %720 = vmatprep.subr.bf16.mxu0 %v657
      %721 = vmatpush1.bf16.msra.mxu0 %v656
      %722 = vmatprep.subr.bf16.mxu0 %v659
      %723 = vmatpush1.bf16.msra.mxu0 %v658
      %724 = vmatprep.subr.bf16.mxu0 %v661
      %725 = vmatpush1.bf16.msra.mxu0 %v660
      %726 = vmatprep.mubr.bf16.mxu0 %v503
      %727 = vmatmul.mubr.bf16.gmra.mrb[0].mxu0 %v502
      %v728 = vpop.f32.mrb[0].mxu0
      %v729 = vadd.f32 %v447, %v728
      %v730 = vpop.f32.mrb[0].mxu0
      %v731 = vadd.f32 %v451, %v730
      %v732 = vpop.f32.mrb[0].mxu0
      %v733 = vadd.f32 %v447, %v732
      %v734 = vpop.f32.mrb[0].mxu0
      %v735 = vadd.f32 %v451, %v734
      %736 = vmatprep.mubr.bf16.mxu0 %v505
      %737 = vmatmul.mubr.bf16.gmra.mrb[0].mxu0 %v504
      %v738 = vpop.f32.mrb[0].mxu0
      %v739 = vadd.f32 %v447, %v738
      %v740 = vpop.f32.mrb[0].mxu0
      %v741 = vadd.f32 %v451, %v740
      %v742 = vpop.f32.mrb[0].mxu0
      %v743 = vadd.f32 %v447, %v742
      %v744 = vpop.f32.mrb[0].mxu0
      %v745 = vadd.f32 %v451, %v744
      %746 = vmatprep.mubr.bf16.mxu0 %v507
      %747 = vmatmul.mubr.bf16.gmra.mrb[0].mxu0 %v506
      %v748 = vpop.f32.mrb[0].mxu0
      %v749 = vadd.f32 %v447, %v748
      %v750 = vpop.f32.mrb[0].mxu0
      %v751 = vadd.f32 %v451, %v750
      %v752 = vpop.f32.mrb[0].mxu0
      %v753 = vadd.f32 %v447, %v752
      %v754 = vpop.f32.mrb[0].mxu0
      %v755 = vadd.f32 %v451, %v754
      %756 = vmatprep.mubr.bf16.mxu0 %v509
      %757 = vmatmul.mubr.bf16.gmra.mrb[0].mxu0 %v508
      %v758 = vpop.f32.mrb[0].mxu0
      %v759 = vadd.f32 %v447, %v758
      %v760 = vpop.f32.mrb[0].mxu0
      %v761 = vadd.f32 %v451, %v760
      %v762 = vpop.f32.mrb[0].mxu0
      %v763 = vadd.f32 %v447, %v762
      %v764 = vpop.f32.mrb[0].mxu0
      %v765 = vadd.f32 %v451, %v764
      %766 = vmatprep.mubr.bf16.mxu0 %v511
      %767 = vmatmul.mubr.bf16.gmra.mrb[0].mxu0 %v510
      %v768 = vpop.f32.mrb[0].mxu0
      %v769 = vadd.f32 %v447, %v768
      %v770 = vpop.f32.mrb[0].mxu0
      %v771 = vadd.f32 %v451, %v770
      %v772 = vpop.f32.mrb[0].mxu0
      %v773 = vadd.f32 %v447, %v772
      %v774 = vpop.f32.mrb[0].mxu0
      %v775 = vadd.f32 %v451, %v774
      %776 = vmatprep.mubr.bf16.mxu0 %v513
      %777 = vmatmul.mubr.bf16.gmra.mrb[0].mxu0 %v512
      %v778 = vpop.f32.mrb[0].mxu0
      %v779 = vadd.f32 %v447, %v778
      %v780 = vpop.f32.mrb[0].mxu0
      %v781 = vadd.f32 %v451, %v780
      %v782 = vpop.f32.mrb[0].mxu0
      %v783 = vadd.f32 %v447, %v782
      %v784 = vpop.f32.mrb[0].mxu0
      %v785 = vadd.f32 %v451, %v784
      %786 = vmatprep.mubr.bf16.mxu0 %v515
      %787 = vmatmul.mubr.bf16.gmra.mrb[0].mxu0 %v514
      %v788 = vpop.f32.mrb[0].mxu0
      %v789 = vadd.f32 %v447, %v788
      %v790 = vpop.f32.mrb[0].mxu0
      %v791 = vadd.f32 %v451, %v790
      %v792 = vpop.f32.mrb[0].mxu0
      %v793 = vadd.f32 %v447, %v792
      %v794 = vpop.f32.mrb[0].mxu0
      %v795 = vadd.f32 %v451, %v794
      %796 = vmatprep.mubr.bf16.mxu0 %v517
      %797 = vmatmul.mubr.bf16.gmra.mrb[0].mxu0 %v516
      %v798 = vpop.f32.mrb[0].mxu0
      %v799 = vadd.f32 %v447, %v798
      %v800 = vpop.f32.mrb[0].mxu0
      %v801 = vadd.f32 %v451, %v800
      %v802 = vpop.f32.mrb[0].mxu0
      %v803 = vadd.f32 %v447, %v802
      %v804 = vpop.f32.mrb[0].mxu0
      %v805 = vadd.f32 %v451, %v804
      %806 = vdwg.mxu0
      %v807 = vmax.f32 %v729, 0.0
      %v808 = vmax.f32 %v731, 0.0
      %v809 = vmax.f32 %v733, 0.0
      %v810 = vmax.f32 %v735, 0.0
      %v811 = vmax.f32 %v739, 0.0
      %v812 = vmax.f32 %v741, 0.0
      %v813 = vmax.f32 %v743, 0.0
      %v814 = vmax.f32 %v745, 0.0
      %v815 = vmax.f32 %v749, 0.0
      %v816 = vmax.f32 %v751, 0.0
      %v817 = vmax.f32 %v753, 0.0
      %v818 = vmax.f32 %v755, 0.0
      %v819 = vmax.f32 %v759, 0.0
      %v820 = vmax.f32 %v761, 0.0
      %v821 = vmax.f32 %v763, 0.0
      %v822 = vmax.f32 %v765, 0.0
      %v823 = vmax.f32 %v769, 0.0
      %v824 = vmax.f32 %v771, 0.0
      %v825 = vmax.f32 %v773, 0.0
      %v826 = vmax.f32 %v775, 0.0
      %v827 = vmax.f32 %v779, 0.0
      %v828 = vmax.f32 %v781, 0.0
      %v829 = vmax.f32 %v783, 0.0
      %v830 = vmax.f32 %v785, 0.0
      %v831 = vmax.f32 %v789, 0.0
      %v832 = vmax.f32 %v791, 0.0
      %v833 = vmax.f32 %v793, 0.0
      %v834 = vmax.f32 %v795, 0.0
      %v835 = vmax.f32 %v799, 0.0
      %v836 = vmax.f32 %v801, 0.0
      %v837 = vmax.f32 %v803, 0.0
      %v838 = vmax.f32 %v805, 0.0
      %v839 = vpack.c.bf16 %v809, %v807
      %v840 = vpack.c.bf16 %v810, %v808
      %v841 = vpack.c.bf16 %v813, %v811
      %v842 = vpack.c.bf16 %v814, %v812
      %v843 = vpack.c.bf16 %v817, %v815
      %v844 = vpack.c.bf16 %v818, %v816
      %v845 = vpack.c.bf16 %v821, %v819
      %v846 = vpack.c.bf16 %v822, %v820
      %v847 = vpack.c.bf16 %v825, %v823
      %v848 = vpack.c.bf16 %v826, %v824
      %v849 = vpack.c.bf16 %v829, %v827
      %v850 = vpack.c.bf16 %v830, %v828
      %v851 = vpack.c.bf16 %v833, %v831
      %v852 = vpack.c.bf16 %v834, %v832
      %v853 = vpack.c.bf16 %v837, %v835
      %v854 = vpack.c.bf16 %v838, %v836
      %v855 = vld [vmem:[%s3] sm:$0xff]
      %v856 = vld [vmem:[%s3 + $0x8] sm:$0xff]
      %v857 = vld [vmem:[%s3 + $0x10] sm:$0xff]
      %v858 = vld [vmem:[%s3 + $0x18] sm:$0xff]
      %v859 = vld [vmem:[%s3 + $0x20] sm:$0xff]
      %v860 = vld [vmem:[%s3 + $0x28] sm:$0xff]
      %v861 = vld [vmem:[%s3 + $0x30] sm:$0xff]
      %v862 = vld [vmem:[%s3 + $0x38] sm:$0xff]
      %v863 = vld [vmem:[%s3 + $0x40] sm:$0xff]
      %v864 = vld [vmem:[%s3 + $0x48] sm:$0xff]
      %v865 = vld [vmem:[%s3 + $0x50] sm:$0xff]
      %v866 = vld [vmem:[%s3 + $0x58] sm:$0xff]
      %v867 = vld [vmem:[%s3 + $0x60] sm:$0xff]
      %v868 = vld [vmem:[%s3 + $0x68] sm:$0xff]
      %v869 = vld [vmem:[%s3 + $0x70] sm:$0xff]
      %v870 = vld [vmem:[%s3 + $0x78] sm:$0xff]
      %v871 = vld [vmem:[%s3 + $0x80] sm:$0xff]
      %v872 = vld [vmem:[%s3 + $0x88] sm:$0xff]
      %v873 = vld [vmem:[%s3 + $0x90] sm:$0xff]
      %v874 = vld [vmem:[%s3 + $0x98] sm:$0xff]
      %v875 = vld [vmem:[%s3 + $0xa0] sm:$0xff]
      %v876 = vld [vmem:[%s3 + $0xa8] sm:$0xff]
      %v877 = vld [vmem:[%s3 + $0xb0] sm:$0xff]
      %v878 = vld [vmem:[%s3 + $0xb8] sm:$0xff]
      %v879 = vld [vmem:[%s3 + $0xc0] sm:$0xff]
      %v880 = vld [vmem:[%s3 + $0xc8] sm:$0xff]
      %v881 = vld [vmem:[%s3 + $0xd0] sm:$0xff]
      %v882 = vld [vmem:[%s3 + $0xd8] sm:$0xff]
      %v883 = vld [vmem:[%s3 + $0xe0] sm:$0xff]
      %v884 = vld [vmem:[%s3 + $0xe8] sm:$0xff]
      %v885 = vld [vmem:[%s3 + $0xf0] sm:$0xff]
      %v886 = vld [vmem:[%s3 + $0xf8] sm:$0xff]
      %v887 = vld [vmem:[%s4] sm:$0x3]
      %v889 = vlaneseq
      %v890 = vshrl.u32 %v889, 7
      %v891 = vsub.s32 0, %v890
      %v892 = vrot.slane %v887, %v891
      %v893 = vlaneseq
      %v894 = vshrl.u32 %v893, 7
      %v895 = vsub.s32 1, %v894
      %v896 = vrot.slane %v887, %v895
      %v931 = vunpack.c.l.b16 %v855
      %v932 = vunpack.c.h.b16 %v855
      %v933 = vunpack.c.l.b16 %v856
      %v934 = vunpack.c.h.b16 %v856
      %v935 = vunpack.c.l.b16 %v857
      %v936 = vunpack.c.h.b16 %v857
      %v937 = vunpack.c.l.b16 %v858
      %v938 = vunpack.c.h.b16 %v858
      %v939 = vunpack.c.l.b16 %v859
      %v940 = vunpack.c.h.b16 %v859
      %v941 = vunpack.c.l.b16 %v860
      %v942 = vunpack.c.h.b16 %v860
      %v943 = vunpack.c.l.b16 %v861
      %v944 = vunpack.c.h.b16 %v861
      %v945 = vunpack.c.l.b16 %v862
      %v946 = vunpack.c.h.b16 %v862
      %v947 = vunpack.c.l.b16 %v863
      %v948 = vunpack.c.h.b16 %v863
      %v949 = vunpack.c.l.b16 %v864
      %v950 = vunpack.c.h.b16 %v864
      %v951 = vunpack.c.l.b16 %v865
      %v952 = vunpack.c.h.b16 %v865
      %v953 = vunpack.c.l.b16 %v866
      %v954 = vunpack.c.h.b16 %v866
      %v955 = vunpack.c.l.b16 %v867
      %v956 = vunpack.c.h.b16 %v867
      %v957 = vunpack.c.l.b16 %v868
      %v958 = vunpack.c.h.b16 %v868
      %v959 = vunpack.c.l.b16 %v869
      %v960 = vunpack.c.h.b16 %v869
      %v961 = vunpack.c.l.b16 %v870
      %v962 = vunpack.c.h.b16 %v870
      %v963 = vunpack.c.l.b16 %v871
      %v964 = vunpack.c.h.b16 %v871
      %v965 = vunpack.c.l.b16 %v872
      %v966 = vunpack.c.h.b16 %v872
      %v967 = vunpack.c.l.b16 %v873
      %v968 = vunpack.c.h.b16 %v873
      %v969 = vunpack.c.l.b16 %v874
      %v970 = vunpack.c.h.b16 %v874
      %v971 = vunpack.c.l.b16 %v875
      %v972 = vunpack.c.h.b16 %v875
      %v973 = vunpack.c.l.b16 %v876
      %v974 = vunpack.c.h.b16 %v876
      %v975 = vunpack.c.l.b16 %v877
      %v976 = vunpack.c.h.b16 %v877
      %v977 = vunpack.c.l.b16 %v878
      %v978 = vunpack.c.h.b16 %v878
      %v979 = vunpack.c.l.b16 %v879
      %v980 = vunpack.c.h.b16 %v879
      %v981 = vunpack.c.l.b16 %v880
      %v982 = vunpack.c.h.b16 %v880
      %v983 = vunpack.c.l.b16 %v881
      %v984 = vunpack.c.h.b16 %v881
      %v985 = vunpack.c.l.b16 %v882
      %v986 = vunpack.c.h.b16 %v882
      %v987 = vunpack.c.l.b16 %v883
      %v988 = vunpack.c.h.b16 %v883
      %v989 = vunpack.c.l.b16 %v884
      %v990 = vunpack.c.h.b16 %v884
      %v991 = vunpack.c.l.b16 %v885
      %v992 = vunpack.c.h.b16 %v885
      %v993 = vunpack.c.l.b16 %v886
      %v994 = vunpack.c.h.b16 %v886
      %v995 = vpack.c.b16 %v933, %v931
      %v996 = vpack.c.b16 %v934, %v932
      %v997 = vpack.c.b16 %v937, %v935
      %v998 = vpack.c.b16 %v938, %v936
      %v999 = vpack.c.b16 %v941, %v939
      %v1000 = vpack.c.b16 %v942, %v940
      %v1001 = vpack.c.b16 %v945, %v943
      %v1002 = vpack.c.b16 %v946, %v944
      %v1003 = vpack.c.b16 %v949, %v947
      %v1004 = vpack.c.b16 %v950, %v948
      %v1005 = vpack.c.b16 %v953, %v951
      %v1006 = vpack.c.b16 %v954, %v952
      %v1007 = vpack.c.b16 %v957, %v955
      %v1008 = vpack.c.b16 %v958, %v956
      %v1009 = vpack.c.b16 %v961, %v959
      %v1010 = vpack.c.b16 %v962, %v960
      %v1011 = vpack.c.b16 %v965, %v963
      %v1012 = vpack.c.b16 %v966, %v964
      %v1013 = vpack.c.b16 %v969, %v967
      %v1014 = vpack.c.b16 %v970, %v968
      %v1015 = vpack.c.b16 %v973, %v971
      %v1016 = vpack.c.b16 %v974, %v972
      %v1017 = vpack.c.b16 %v977, %v975
      %v1018 = vpack.c.b16 %v978, %v976
      %v1019 = vpack.c.b16 %v981, %v979
      %v1020 = vpack.c.b16 %v982, %v980
      %v1021 = vpack.c.b16 %v985, %v983
      %v1022 = vpack.c.b16 %v986, %v984
      %v1023 = vpack.c.b16 %v989, %v987
      %v1024 = vpack.c.b16 %v990, %v988
      %v1025 = vpack.c.b16 %v993, %v991
      %v1026 = vpack.c.b16 %v994, %v992
      %1059 = vmatprep.subr.bf16.mxu0 %v996
      %1060 = vmatpush1.bf16.msra.mxu0 %v995
      %1061 = vmatprep.subr.bf16.mxu0 %v998
      %1062 = vmatpush1.bf16.msra.mxu0 %v997
      %1063 = vmatprep.subr.bf16.mxu0 %v1000
      %1064 = vmatpush1.bf16.msra.mxu0 %v999
      %1065 = vmatprep.subr.bf16.mxu0 %v1002
      %1066 = vmatpush1.bf16.msra.mxu0 %v1001
      %1067 = vmatprep.subr.bf16.mxu0 %v1004
      %1068 = vmatpush1.bf16.msra.mxu0 %v1003
      %1069 = vmatprep.subr.bf16.mxu0 %v1006
      %1070 = vmatpush1.bf16.msra.mxu0 %v1005
      %1071 = vmatprep.subr.bf16.mxu0 %v1008
      %1072 = vmatpush1.bf16.msra.mxu0 %v1007
      %1073 = vmatprep.subr.bf16.mxu0 %v1010
      %1074 = vmatpush1.bf16.msra.mxu0 %v1009
      %1075 = vmatprep.subr.bf16.mxu0 %v1012
      %1076 = vmatpush1.bf16.msra.mxu0 %v1011
      %1077 = vmatprep.subr.bf16.mxu0 %v1014
      %1078 = vmatpush1.bf16.msra.mxu0 %v1013
      %1079 = vmatprep.subr.bf16.mxu0 %v1016
      %1080 = vmatpush1.bf16.msra.mxu0 %v1015
      %1081 = vmatprep.subr.bf16.mxu0 %v1018
      %1082 = vmatpush1.bf16.msra.mxu0 %v1017
      %1083 = vmatprep.subr.bf16.mxu0 %v1020
      %1084 = vmatpush1.bf16.msra.mxu0 %v1019
      %1085 = vmatprep.subr.bf16.mxu0 %v1022
      %1086 = vmatpush1.bf16.msra.mxu0 %v1021
      %1087 = vmatprep.subr.bf16.mxu0 %v1024
      %1088 = vmatpush1.bf16.msra.mxu0 %v1023
      %1089 = vmatprep.subr.bf16.mxu0 %v1026
      %1090 = vmatpush1.bf16.msra.mxu0 %v1025
      %1091 = vmatprep.mubr.bf16.mxu0 %v840
      %1092 = vmatmul.mubr.bf16.gmra.mrb[0].mxu0 %v839
      %v1093 = vpop.f32.mrb[0].mxu0
      %v1094 = vadd.f32 %v892, %v1093
      %v1095 = vpop.f32.mrb[0].mxu0
      %v1096 = vadd.f32 %v896, %v1095
      %v1097 = vpop.f32.mrb[0].mxu0
      %v1098 = vadd.f32 %v892, %v1097
      %v1099 = vpop.f32.mrb[0].mxu0
      %v1100 = vadd.f32 %v896, %v1099
      %1101 = vmatprep.mubr.bf16.mxu0 %v842
      %1102 = vmatmul.mubr.bf16.gmra.mrb[0].mxu0 %v841
      %v1103 = vpop.f32.mrb[0].mxu0
      %v1104 = vadd.f32 %v892, %v1103
      %v1105 = vpop.f32.mrb[0].mxu0
      %v1106 = vadd.f32 %v896, %v1105
      %v1107 = vpop.f32.mrb[0].mxu0
      %v1108 = vadd.f32 %v892, %v1107
      %v1109 = vpop.f32.mrb[0].mxu0
      %v1110 = vadd.f32 %v896, %v1109
      %1111 = vmatprep.mubr.bf16.mxu0 %v844
      %1112 = vmatmul.mubr.bf16.gmra.mrb[0].mxu0 %v843
      %v1113 = vpop.f32.mrb[0].mxu0
      %v1114 = vadd.f32 %v892, %v1113
      %v1115 = vpop.f32.mrb[0].mxu0
      %v1116 = vadd.f32 %v896, %v1115
      %v1117 = vpop.f32.mrb[0].mxu0
      %v1118 = vadd.f32 %v892, %v1117
      %v1119 = vpop.f32.mrb[0].mxu0
      %v1120 = vadd.f32 %v896, %v1119
      %1121 = vmatprep.mubr.bf16.mxu0 %v846
      %1122 = vmatmul.mubr.bf16.gmra.mrb[0].mxu0 %v845
      %v1123 = vpop.f32.mrb[0].mxu0
      %v1124 = vadd.f32 %v892, %v1123
      %v1125 = vpop.f32.mrb[0].mxu0
      %v1126 = vadd.f32 %v896, %v1125
      %v1127 = vpop.f32.mrb[0].mxu0
      %v1128 = vadd.f32 %v892, %v1127
      %v1129 = vpop.f32.mrb[0].mxu0
      %v1130 = vadd.f32 %v896, %v1129
      %1131 = vmatprep.mubr.bf16.mxu0 %v848
      %1132 = vmatmul.mubr.bf16.gmra.mrb[0].mxu0 %v847
      %v1133 = vpop.f32.mrb[0].mxu0
      %v1134 = vadd.f32 %v892, %v1133
      %v1135 = vpop.f32.mrb[0].mxu0
      %v1136 = vadd.f32 %v896, %v1135
      %v1137 = vpop.f32.mrb[0].mxu0
      %v1138 = vadd.f32 %v892, %v1137
      %v1139 = vpop.f32.mrb[0].mxu0
      %v1140 = vadd.f32 %v896, %v1139
      %1141 = vmatprep.mubr.bf16.mxu0 %v850
      %1142 = vmatmul.mubr.bf16.gmra.mrb[0].mxu0 %v849
      %v1143 = vpop.f32.mrb[0].mxu0
      %v1144 = vadd.f32 %v892, %v1143
      %v1145 = vpop.f32.mrb[0].mxu0
      %v1146 = vadd.f32 %v896, %v1145
      %v1147 = vpop.f32.mrb[0].mxu0
      %v1148 = vadd.f32 %v892, %v1147
      %v1149 = vpop.f32.mrb[0].mxu0
      %v1150 = vadd.f32 %v896, %v1149
      %1151 = vmatprep.mubr.bf16.mxu0 %v852
      %1152 = vmatmul.mubr.bf16.gmra.mrb[0].mxu0 %v851
      %v1153 = vpop.f32.mrb[0].mxu0
      %v1154 = vadd.f32 %v892, %v1153
      %v1155 = vpop.f32.mrb[0].mxu0
      %v1156 = vadd.f32 %v896, %v1155
      %v1157 = vpop.f32.mrb[0].mxu0
      %v1158 = vadd.f32 %v892, %v1157
      %v1159 = vpop.f32.mrb[0].mxu0
      %v1160 = vadd.f32 %v896, %v1159
      %1161 = vmatprep.mubr.bf16.mxu0 %v854
      %1162 = vmatmul.mubr.bf16.gmra.mrb[0].mxu0 %v853
      %v1163 = vpop.f32.mrb[0].mxu0
      %v1164 = vadd.f32 %v892, %v1163
      %v1165 = vpop.f32.mrb[0].mxu0
      %v1166 = vadd.f32 %v896, %v1165
      %v1167 = vpop.f32.mrb[0].mxu0
      %v1168 = vadd.f32 %v892, %v1167
      %v1169 = vpop.f32.mrb[0].mxu0
      %v1170 = vadd.f32 %v896, %v1169
      %1171 = vdwg.mxu0
      %v1172 = vmax.f32 %v1094, 0.0
      %v1173 = vmax.f32 %v1096, 0.0
      %v1174 = vmax.f32 %v1098, 0.0
      %v1175 = vmax.f32 %v1100, 0.0
      %v1176 = vmax.f32 %v1104, 0.0
      %v1177 = vmax.f32 %v1106, 0.0
      %v1178 = vmax.f32 %v1108, 0.0
      %v1179 = vmax.f32 %v1110, 0.0
      %v1180 = vmax.f32 %v1114, 0.0
      %v1181 = vmax.f32 %v1116, 0.0
      %v1182 = vmax.f32 %v1118, 0.0
      %v1183 = vmax.f32 %v1120, 0.0
      %v1184 = vmax.f32 %v1124, 0.0
      %v1185 = vmax.f32 %v1126, 0.0
      %v1186 = vmax.f32 %v1128, 0.0
      %v1187 = vmax.f32 %v1130, 0.0
      %v1188 = vmax.f32 %v1134, 0.0
      %v1189 = vmax.f32 %v1136, 0.0
      %v1190 = vmax.f32 %v1138, 0.0
      %v1191 = vmax.f32 %v1140, 0.0
      %v1192 = vmax.f32 %v1144, 0.0
      %v1193 = vmax.f32 %v1146, 0.0
      %v1194 = vmax.f32 %v1148, 0.0
      %v1195 = vmax.f32 %v1150, 0.0
      %v1196 = vmax.f32 %v1154, 0.0
      %v1197 = vmax.f32 %v1156, 0.0
      %v1198 = vmax.f32 %v1158, 0.0
      %v1199 = vmax.f32 %v1160, 0.0
      %v1200 = vmax.f32 %v1164, 0.0
      %v1201 = vmax.f32 %v1166, 0.0
      %v1202 = vmax.f32 %v1168, 0.0
      %v1203 = vmax.f32 %v1170, 0.0
      %v1204 = vpack.c.bf16 %v1174, %v1172
      %v1205 = vpack.c.bf16 %v1175, %v1173
      %v1206 = vpack.c.bf16 %v1178, %v1176
      %v1207 = vpack.c.bf16 %v1179, %v1177
      %v1208 = vpack.c.bf16 %v1182, %v1180
      %v1209 = vpack.c.bf16 %v1183, %v1181
      %v1210 = vpack.c.bf16 %v1186, %v1184
      %v1211 = vpack.c.bf16 %v1187, %v1185
      %v1212 = vpack.c.bf16 %v1190, %v1188
      %v1213 = vpack.c.bf16 %v1191, %v1189
      %v1214 = vpack.c.bf16 %v1194, %v1192
      %v1215 = vpack.c.bf16 %v1195, %v1193
      %v1216 = vpack.c.bf16 %v1198, %v1196
      %v1217 = vpack.c.bf16 %v1199, %v1197
      %v1218 = vpack.c.bf16 %v1202, %v1200
      %v1219 = vpack.c.bf16 %v1203, %v1201
      %v1220 = vld [vmem:[%s5] sm:$0xf]
      %v1221 = vld [vmem:[%s5 + $0x4] sm:$0xf]
      %v1222 = vld [vmem:[%s5 + $0x8] sm:$0xf]
      %v1223 = vld [vmem:[%s5 + $0xc] sm:$0xf]
      %v1224 = vld [vmem:[%s5 + $0x10] sm:$0xf]
      %v1225 = vld [vmem:[%s5 + $0x14] sm:$0xf]
      %v1226 = vld [vmem:[%s5 + $0x18] sm:$0xf]
      %v1227 = vld [vmem:[%s5 + $0x1c] sm:$0xf]
      %v1228 = vld [vmem:[%s5 + $0x20] sm:$0xf]
      %v1229 = vld [vmem:[%s5 + $0x24] sm:$0xf]
      %v1230 = vld [vmem:[%s5 + $0x28] sm:$0xf]
      %v1231 = vld [vmem:[%s5 + $0x2c] sm:$0xf]
      %v1232 = vld [vmem:[%s5 + $0x30] sm:$0xf]
      %v1233 = vld [vmem:[%s5 + $0x34] sm:$0xf]
      %v1234 = vld [vmem:[%s5 + $0x38] sm:$0xf]
      %v1235 = vld [vmem:[%s5 + $0x3c] sm:$0xf]
      %v1236 = vld [vmem:[%s5 + $0x40] sm:$0xf]
      %v1237 = vld [vmem:[%s5 + $0x44] sm:$0xf]
      %v1238 = vld [vmem:[%s5 + $0x48] sm:$0xf]
      %v1239 = vld [vmem:[%s5 + $0x4c] sm:$0xf]
      %v1240 = vld [vmem:[%s5 + $0x50] sm:$0xf]
      %v1241 = vld [vmem:[%s5 + $0x54] sm:$0xf]
      %v1242 = vld [vmem:[%s5 + $0x58] sm:$0xf]
      %v1243 = vld [vmem:[%s5 + $0x5c] sm:$0xf]
      %v1244 = vld [vmem:[%s5 + $0x60] sm:$0xf]
      %v1245 = vld [vmem:[%s5 + $0x64] sm:$0xf]
      %v1246 = vld [vmem:[%s5 + $0x68] sm:$0xf]
      %v1247 = vld [vmem:[%s5 + $0x6c] sm:$0xf]
      %v1248 = vld [vmem:[%s5 + $0x70] sm:$0xf]
      %v1249 = vld [vmem:[%s5 + $0x74] sm:$0xf]
      %v1250 = vld [vmem:[%s5 + $0x78] sm:$0xf]
      %v1251 = vld [vmem:[%s5 + $0x7c] sm:$0xf]
      %v1252 = vld [vmem:[%s6] sm:$0x1]
      %v1254 = vlaneseq
      %v1255 = vshrl.u32 %v1254, 7
      %v1256 = vsub.s32 0, %v1255
      %v1257 = vrot.slane %v1252, %v1256
      %v1291 = vunpack.c.l.b16 %v1220
      %v1292 = vunpack.c.l.b16 %v1221
      %v1293 = vunpack.c.l.b16 %v1222
      %v1294 = vunpack.c.l.b16 %v1223
      %v1295 = vunpack.c.l.b16 %v1224
      %v1296 = vunpack.c.l.b16 %v1225
      %v1297 = vunpack.c.l.b16 %v1226
      %v1298 = vunpack.c.l.b16 %v1227
      %v1299 = vunpack.c.l.b16 %v1228
      %v1300 = vunpack.c.l.b16 %v1229
      %v1301 = vunpack.c.l.b16 %v1230
      %v1302 = vunpack.c.l.b16 %v1231
      %v1303 = vunpack.c.l.b16 %v1232
      %v1304 = vunpack.c.l.b16 %v1233
      %v1305 = vunpack.c.l.b16 %v1234
      %v1306 = vunpack.c.l.b16 %v1235
      %v1307 = vunpack.c.l.b16 %v1236
      %v1308 = vunpack.c.l.b16 %v1237
      %v1309 = vunpack.c.l.b16 %v1238
      %v1310 = vunpack.c.l.b16 %v1239
      %v1311 = vunpack.c.l.b16 %v1240
      %v1312 = vunpack.c.l.b16 %v1241
      %v1313 = vunpack.c.l.b16 %v1242
      %v1314 = vunpack.c.l.b16 %v1243
      %v1315 = vunpack.c.l.b16 %v1244
      %v1316 = vunpack.c.l.b16 %v1245
      %v1317 = vunpack.c.l.b16 %v1246
      %v1318 = vunpack.c.l.b16 %v1247
      %v1319 = vunpack.c.l.b16 %v1248
      %v1320 = vunpack.c.l.b16 %v1249
      %v1321 = vunpack.c.l.b16 %v1250
      %v1322 = vunpack.c.l.b16 %v1251
      %v1323 = vpack.c.b16 %v1292, %v1291
      %v1324 = vpack.c.b16 %v1294, %v1293
      %v1325 = vpack.c.b16 %v1296, %v1295
      %v1326 = vpack.c.b16 %v1298, %v1297
      %v1327 = vpack.c.b16 %v1300, %v1299
      %v1328 = vpack.c.b16 %v1302, %v1301
      %v1329 = vpack.c.b16 %v1304, %v1303
      %v1330 = vpack.c.b16 %v1306, %v1305
      %v1331 = vpack.c.b16 %v1308, %v1307
      %v1332 = vpack.c.b16 %v1310, %v1309
      %v1333 = vpack.c.b16 %v1312, %v1311
      %v1334 = vpack.c.b16 %v1314, %v1313
      %v1335 = vpack.c.b16 %v1316, %v1315
      %v1336 = vpack.c.b16 %v1318, %v1317
      %v1337 = vpack.c.b16 %v1320, %v1319
      %v1338 = vpack.c.b16 %v1322, %v1321
      %1355 = vmatprep.subr.bf16.mxu0 0
      %1356 = vmatpush1.bf16.msra.mxu0 %v1323
      %1357 = vmatprep.subr.bf16.mxu0 0
      %1358 = vmatpush1.bf16.msra.mxu0 %v1324
      %1359 = vmatprep.subr.bf16.mxu0 0
      %1360 = vmatpush1.bf16.msra.mxu0 %v1325
      %1361 = vmatprep.subr.bf16.mxu0 0
      %1362 = vmatpush1.bf16.msra.mxu0 %v1326
      %1363 = vmatprep.subr.bf16.mxu0 0
      %1364 = vmatpush1.bf16.msra.mxu0 %v1327
      %1365 = vmatprep.subr.bf16.mxu0 0
      %1366 = vmatpush1.bf16.msra.mxu0 %v1328
      %1367 = vmatprep.subr.bf16.mxu0 0
      %1368 = vmatpush1.bf16.msra.mxu0 %v1329
      %1369 = vmatprep.subr.bf16.mxu0 0
      %1370 = vmatpush1.bf16.msra.mxu0 %v1330
      %1371 = vmatprep.subr.bf16.mxu0 0
      %1372 = vmatpush1.bf16.msra.mxu0 %v1331
      %1373 = vmatprep.subr.bf16.mxu0 0
      %1374 = vmatpush1.bf16.msra.mxu0 %v1332
      %1375 = vmatprep.subr.bf16.mxu0 0
      %1376 = vmatpush1.bf16.msra.mxu0 %v1333
      %1377 = vmatprep.subr.bf16.mxu0 0
      %1378 = vmatpush1.bf16.msra.mxu0 %v1334
      %1379 = vmatprep.subr.bf16.mxu0 0
      %1380 = vmatpush1.bf16.msra.mxu0 %v1335
      %1381 = vmatprep.subr.bf16.mxu0 0
      %1382 = vmatpush1.bf16.msra.mxu0 %v1336
      %1383 = vmatprep.subr.bf16.mxu0 0
      %1384 = vmatpush1.bf16.msra.mxu0 %v1337
      %1385 = vmatprep.subr.bf16.mxu0 0
      %1386 = vmatpush1.bf16.msra.mxu0 %v1338
      %1387 = vmatprep.mubr.bf16.mxu0 %v1205
      %1388 = vmatmul.mubr.bf16.gmra.mrb[0].mxu0 %v1204
      %v1389 = vpop.f32.mrb[0].mxu0
      %v1390 = vadd.f32 %v1257, %v1389
      %v1391 = vpop.f32.mrb[0].mxu0
      %v1392 = vpop.f32.mrb[0].mxu0
      %v1393 = vadd.f32 %v1257, %v1392
      %v1394 = vpop.f32.mrb[0].mxu0
      %1395 = vmatprep.mubr.bf16.mxu0 %v1207
      %1396 = vmatmul.mubr.bf16.gmra.mrb[0].mxu0 %v1206
      %v1397 = vpop.f32.mrb[0].mxu0
      %v1398 = vadd.f32 %v1257, %v1397
      %v1399 = vpop.f32.mrb[0].mxu0
      %v1400 = vpop.f32.mrb[0].mxu0
      %v1401 = vadd.f32 %v1257, %v1400
      %v1402 = vpop.f32.mrb[0].mxu0
      %1403 = vmatprep.mubr.bf16.mxu0 %v1209
      %1404 = vmatmul.mubr.bf16.gmra.mrb[0].mxu0 %v1208
      %v1405 = vpop.f32.mrb[0].mxu0
      %v1406 = vadd.f32 %v1257, %v1405
      %v1407 = vpop.f32.mrb[0].mxu0
      %v1408 = vpop.f32.mrb[0].mxu0
      %v1409 = vadd.f32 %v1257, %v1408
      %v1410 = vpop.f32.mrb[0].mxu0
      %1411 = vmatprep.mubr.bf16.mxu0 %v1211
      %1412 = vmatmul.mubr.bf16.gmra.mrb[0].mxu0 %v1210
      %v1413 = vpop.f32.mrb[0].mxu0
      %v1414 = vadd.f32 %v1257, %v1413
      %v1415 = vpop.f32.mrb[0].mxu0
      %v1416 = vpop.f32.mrb[0].mxu0
      %v1417 = vadd.f32 %v1257, %v1416
      %v1418 = vpop.f32.mrb[0].mxu0
      %1419 = vmatprep.mubr.bf16.mxu0 %v1213
      %1420 = vmatmul.mubr.bf16.gmra.mrb[0].mxu0 %v1212
      %v1421 = vpop.f32.mrb[0].mxu0
      %v1422 = vadd.f32 %v1257, %v1421
      %v1423 = vpop.f32.mrb[0].mxu0
      %v1424 = vpop.f32.mrb[0].mxu0
      %v1425 = vadd.f32 %v1257, %v1424
      %v1426 = vpop.f32.mrb[0].mxu0
      %1427 = vmatprep.mubr.bf16.mxu0 %v1215
      %1428 = vmatmul.mubr.bf16.gmra.mrb[0].mxu0 %v1214
      %v1429 = vpop.f32.mrb[0].mxu0
      %v1430 = vadd.f32 %v1257, %v1429
      %v1431 = vpop.f32.mrb[0].mxu0
      %v1432 = vpop.f32.mrb[0].mxu0
      %v1433 = vadd.f32 %v1257, %v1432
      %v1434 = vpop.f32.mrb[0].mxu0
      %1435 = vmatprep.mubr.bf16.mxu0 %v1217
      %1436 = vmatmul.mubr.bf16.gmra.mrb[0].mxu0 %v1216
      %v1437 = vpop.f32.mrb[0].mxu0
      %v1438 = vadd.f32 %v1257, %v1437
      %v1439 = vpop.f32.mrb[0].mxu0
      %v1440 = vpop.f32.mrb[0].mxu0
      %v1441 = vadd.f32 %v1257, %v1440
      %v1442 = vpop.f32.mrb[0].mxu0
      %1443 = vmatprep.mubr.bf16.mxu0 %v1219
      %1444 = vmatmul.mubr.bf16.gmra.mrb[0].mxu0 %v1218
      %v1445 = vpop.f32.mrb[0].mxu0
      %v1446 = vadd.f32 %v1257, %v1445
      %v1447 = vpop.f32.mrb[0].mxu0
      %v1448 = vpop.f32.mrb[0].mxu0
      %v1449 = vadd.f32 %v1257, %v1448
      %v1450 = vpop.f32.mrb[0].mxu0
      %1451 = vdwg.mxu0
      %v1452 = vmax.f32 %v1390, 0.0
      %v1453 = vmax.f32 %v1393, 0.0
      %v1454 = vmax.f32 %v1398, 0.0
      %v1455 = vmax.f32 %v1401, 0.0
      %v1456 = vmax.f32 %v1406, 0.0
      %v1457 = vmax.f32 %v1409, 0.0
      %v1458 = vmax.f32 %v1414, 0.0
      %v1459 = vmax.f32 %v1417, 0.0
      %v1460 = vmax.f32 %v1422, 0.0
      %v1461 = vmax.f32 %v1425, 0.0
      %v1462 = vmax.f32 %v1430, 0.0
      %v1463 = vmax.f32 %v1433, 0.0
      %v1464 = vmax.f32 %v1438, 0.0
      %v1465 = vmax.f32 %v1441, 0.0
      %v1466 = vmax.f32 %v1446, 0.0
      %v1467 = vmax.f32 %v1449, 0.0
      %v1468 = vpack.c.bf16 %v1453, %v1452
      %v1469 = vpack.c.bf16 %v1455, %v1454
      %v1470 = vpack.c.bf16 %v1457, %v1456
      %v1471 = vpack.c.bf16 %v1459, %v1458
      %v1472 = vpack.c.bf16 %v1461, %v1460
      %v1473 = vpack.c.bf16 %v1463, %v1462
      %v1474 = vpack.c.bf16 %v1465, %v1464
      %v1475 = vpack.c.bf16 %v1467, %v1466
      %v1476 = vld [vmem:[%s7] sm:$0xf]
      %v1477 = vld [vmem:[%s7 + $0x4] sm:$0xf]
      %v1478 = vld [vmem:[%s7 + $0x8] sm:$0xf]
      %v1479 = vld [vmem:[%s7 + $0xc] sm:$0xf]
      %v1480 = vld [vmem:[%s7 + $0x10] sm:$0xf]
      %v1481 = vld [vmem:[%s7 + $0x14] sm:$0xf]
      %v1482 = vld [vmem:[%s7 + $0x18] sm:$0xf]
      %v1483 = vld [vmem:[%s7 + $0x1c] sm:$0xf]
      %v1484 = vld [vmem:[%s7 + $0x20] sm:$0xf]
      %v1485 = vld [vmem:[%s7 + $0x24] sm:$0xf]
      %v1486 = vld [vmem:[%s7 + $0x28] sm:$0xf]
      %v1487 = vld [vmem:[%s7 + $0x2c] sm:$0xf]
      %v1488 = vld [vmem:[%s7 + $0x30] sm:$0xf]
      %v1489 = vld [vmem:[%s7 + $0x34] sm:$0xf]
      %v1490 = vld [vmem:[%s7 + $0x38] sm:$0xf]
      %v1491 = vld [vmem:[%s7 + $0x3c] sm:$0xf]
      %v1492 = vld [vmem:[%s8] sm:$0x1]
      %v1494 = vlaneseq
      %v1495 = vshrl.u32 %v1494, 7
      %v1496 = vsub.s32 0, %v1495
      %v1497 = vrot.slane %v1492, %v1496
      %v1515 = vunpack.c.l.b16 %v1476
      %v1516 = vunpack.c.l.b16 %v1477
      %v1517 = vunpack.c.l.b16 %v1478
      %v1518 = vunpack.c.l.b16 %v1479
      %v1519 = vunpack.c.l.b16 %v1480
      %v1520 = vunpack.c.l.b16 %v1481
      %v1521 = vunpack.c.l.b16 %v1482
      %v1522 = vunpack.c.l.b16 %v1483
      %v1523 = vunpack.c.l.b16 %v1484
      %v1524 = vunpack.c.l.b16 %v1485
      %v1525 = vunpack.c.l.b16 %v1486
      %v1526 = vunpack.c.l.b16 %v1487
      %v1527 = vunpack.c.l.b16 %v1488
      %v1528 = vunpack.c.l.b16 %v1489
      %v1529 = vunpack.c.l.b16 %v1490
      %v1530 = vunpack.c.l.b16 %v1491
      %v1531 = vpack.c.b16 %v1516, %v1515
      %v1532 = vpack.c.b16 %v1518, %v1517
      %v1533 = vpack.c.b16 %v1520, %v1519
      %v1534 = vpack.c.b16 %v1522, %v1521
      %v1535 = vpack.c.b16 %v1524, %v1523
      %v1536 = vpack.c.b16 %v1526, %v1525
      %v1537 = vpack.c.b16 %v1528, %v1527
      %v1538 = vpack.c.b16 %v1530, %v1529
      %1547 = vmatprep.subr.bf16.mxu0 0
      %1548 = vmatpush1.bf16.msra.mxu0 %v1531
      %1549 = vmatprep.subr.bf16.mxu0 0
      %1550 = vmatpush1.bf16.msra.mxu0 %v1532
      %1551 = vmatprep.subr.bf16.mxu0 0
      %1552 = vmatpush1.bf16.msra.mxu0 %v1533
      %1553 = vmatprep.subr.bf16.mxu0 0
      %1554 = vmatpush1.bf16.msra.mxu0 %v1534
      %1555 = vmatprep.subr.bf16.mxu0 0
      %1556 = vmatpush1.bf16.msra.mxu0 %v1535
      %1557 = vmatprep.subr.bf16.mxu0 0
      %1558 = vmatpush1.bf16.msra.mxu0 %v1536
      %1559 = vmatprep.subr.bf16.mxu0 0
      %1560 = vmatpush1.bf16.msra.mxu0 %v1537
      %1561 = vmatprep.subr.bf16.mxu0 0
      %1562 = vmatpush1.bf16.msra.mxu0 %v1538
      %1563 = vmatprep.subr.bf16.mxu0 0
      %1564 = vmatpush1.bf16.msra.mxu0 0
      %1565 = vmatprep.subr.bf16.mxu0 0
      %1566 = vmatpush1.bf16.msra.mxu0 0
      %1567 = vmatprep.subr.bf16.mxu0 0
      %1568 = vmatpush1.bf16.msra.mxu0 0
      %1569 = vmatprep.subr.bf16.mxu0 0
      %1570 = vmatpush1.bf16.msra.mxu0 0
      %1571 = vmatprep.subr.bf16.mxu0 0
      %1572 = vmatpush1.bf16.msra.mxu0 0
      %1573 = vmatprep.subr.bf16.mxu0 0
      %1574 = vmatpush1.bf16.msra.mxu0 0
      %1575 = vmatprep.subr.bf16.mxu0 0
      %1576 = vmatpush1.bf16.msra.mxu0 0
      %1577 = vmatprep.subr.bf16.mxu0 0
      %1578 = vmatpush1.bf16.msra.mxu0 0
      %1579 = vmatprep.mubr.bf16.mxu0 0
      %1580 = vmatmul.mubr.bf16.gmra.mrb[0].mxu0 %v1468
      %v1581 = vpop.f32.mrb[0].mxu0
      %v1582 = vadd.f32 %v1497, %v1581
      %v1583 = vpop.f32.mrb[0].mxu0
      %v1584 = vpop.f32.mrb[0].mxu0
      %v1585 = vadd.f32 %v1497, %v1584
      %v1586 = vpop.f32.mrb[0].mxu0
      %1587 = vmatprep.mubr.bf16.mxu0 0
      %1588 = vmatmul.mubr.bf16.gmra.mrb[0].mxu0 %v1469
      %v1589 = vpop.f32.mrb[0].mxu0
      %v1590 = vadd.f32 %v1497, %v1589
      %v1591 = vpop.f32.mrb[0].mxu0
      %v1592 = vpop.f32.mrb[0].mxu0
      %v1593 = vadd.f32 %v1497, %v1592
      %v1594 = vpop.f32.mrb[0].mxu0
      %1595 = vmatprep.mubr.bf16.mxu0 0
      %1596 = vmatmul.mubr.bf16.gmra.mrb[0].mxu0 %v1470
      %v1597 = vpop.f32.mrb[0].mxu0
      %v1598 = vadd.f32 %v1497, %v1597
      %v1599 = vpop.f32.mrb[0].mxu0
      %v1600 = vpop.f32.mrb[0].mxu0
      %v1601 = vadd.f32 %v1497, %v1600
      %v1602 = vpop.f32.mrb[0].mxu0
      %1603 = vmatprep.mubr.bf16.mxu0 0
      %1604 = vmatmul.mubr.bf16.gmra.mrb[0].mxu0 %v1471
      %v1605 = vpop.f32.mrb[0].mxu0
      %v1606 = vadd.f32 %v1497, %v1605
      %v1607 = vpop.f32.mrb[0].mxu0
      %v1608 = vpop.f32.mrb[0].mxu0
      %v1609 = vadd.f32 %v1497, %v1608
      %v1610 = vpop.f32.mrb[0].mxu0
      %1611 = vmatprep.mubr.bf16.mxu0 0
      %1612 = vmatmul.mubr.bf16.gmra.mrb[0].mxu0 %v1472
      %v1613 = vpop.f32.mrb[0].mxu0
      %v1614 = vadd.f32 %v1497, %v1613
      %v1615 = vpop.f32.mrb[0].mxu0
      %v1616 = vpop.f32.mrb[0].mxu0
      %v1617 = vadd.f32 %v1497, %v1616
      %v1618 = vpop.f32.mrb[0].mxu0
      %1619 = vmatprep.mubr.bf16.mxu0 0
      %1620 = vmatmul.mubr.bf16.gmra.mrb[0].mxu0 %v1473
      %v1621 = vpop.f32.mrb[0].mxu0
      %v1622 = vadd.f32 %v1497, %v1621
      %v1623 = vpop.f32.mrb[0].mxu0
      %v1624 = vpop.f32.mrb[0].mxu0
      %v1625 = vadd.f32 %v1497, %v1624
      %v1626 = vpop.f32.mrb[0].mxu0
      %1627 = vmatprep.mubr.bf16.mxu0 0
      %1628 = vmatmul.mubr.bf16.gmra.mrb[0].mxu0 %v1474
      %v1629 = vpop.f32.mrb[0].mxu0
      %v1630 = vadd.f32 %v1497, %v1629
      %v1631 = vpop.f32.mrb[0].mxu0
      %v1632 = vpop.f32.mrb[0].mxu0
      %v1633 = vadd.f32 %v1497, %v1632
      %v1634 = vpop.f32.mrb[0].mxu0
      %1635 = vmatprep.mubr.bf16.mxu0 0
      %1636 = vmatmul.mubr.bf16.gmra.mrb[0].mxu0 %v1475
      %v1637 = vpop.f32.mrb[0].mxu0
      %v1638 = vadd.f32 %v1497, %v1637
      %v1639 = vpop.f32.mrb[0].mxu0
      %v1640 = vpop.f32.mrb[0].mxu0
      %v1641 = vadd.f32 %v1497, %v1640
      %v1642 = vpop.f32.mrb[0].mxu0
      %1643 = vdwg.mxu0
      %v1644 = vmax.f32 %v1582, 0.0
      %v1645 = vmax.f32 %v1585, 0.0
      %v1646 = vmax.f32 %v1590, 0.0
      %v1647 = vmax.f32 %v1593, 0.0
      %v1648 = vmax.f32 %v1598, 0.0
      %v1649 = vmax.f32 %v1601, 0.0
      %v1650 = vmax.f32 %v1606, 0.0
      %v1651 = vmax.f32 %v1609, 0.0
      %v1652 = vmax.f32 %v1614, 0.0
      %v1653 = vmax.f32 %v1617, 0.0
      %v1654 = vmax.f32 %v1622, 0.0
      %v1655 = vmax.f32 %v1625, 0.0
      %v1656 = vmax.f32 %v1630, 0.0
      %v1657 = vmax.f32 %v1633, 0.0
      %v1658 = vmax.f32 %v1638, 0.0
      %v1659 = vmax.f32 %v1641, 0.0
      %v1660 = vpack.c.bf16 %v1645, %v1644
      %v1661 = vpack.c.bf16 %v1647, %v1646
      %v1662 = vpack.c.bf16 %v1649, %v1648
      %v1663 = vpack.c.bf16 %v1651, %v1650
      %v1664 = vpack.c.bf16 %v1653, %v1652
      %v1665 = vpack.c.bf16 %v1655, %v1654
      %v1666 = vpack.c.bf16 %v1657, %v1656
      %v1667 = vpack.c.bf16 %v1659, %v1658
      %v1668 = vld [vmem:[%s9] sm:$0xf]
      %v1669 = vld [vmem:[%s9 + $0x4] sm:$0xf]
      %v1670 = vld [vmem:[%s9 + $0x8] sm:$0xf]
      %v1671 = vld [vmem:[%s9 + $0xc] sm:$0xf]
      %v1672 = vld [vmem:[%s9 + $0x10] sm:$0xf]
      %v1673 = vld [vmem:[%s9 + $0x14] sm:$0xf]
      %v1674 = vld [vmem:[%s9 + $0x18] sm:$0xf]
      %v1675 = vld [vmem:[%s9 + $0x1c] sm:$0xf]
      %v1676 = vld [vmem:[%s9 + $0x20] sm:$0xf]
      %v1677 = vld [vmem:[%s9 + $0x24] sm:$0xf]
      %v1678 = vld [vmem:[%s9 + $0x28] sm:$0xf]
      %v1679 = vld [vmem:[%s9 + $0x2c] sm:$0xf]
      %v1680 = vld [vmem:[%s9 + $0x30] sm:$0xf]
      %v1681 = vld [vmem:[%s9 + $0x34] sm:$0xf]
      %v1682 = vld [vmem:[%s9 + $0x38] sm:$0xf]
      %v1683 = vld [vmem:[%s9 + $0x3c] sm:$0xf]
      %v1684 = vld [vmem:[%s10] sm:$0x1]
      %v1686 = vlaneseq
      %v1687 = vshrl.u32 %v1686, 7
      %v1688 = vsub.s32 0, %v1687
      %v1689 = vrot.slane %v1684, %v1688
      %v1707 = vunpack.c.l.b16 %v1668
      %v1708 = vunpack.c.l.b16 %v1669
      %v1709 = vunpack.c.l.b16 %v1670
      %v1710 = vunpack.c.l.b16 %v1671
      %v1711 = vunpack.c.l.b16 %v1672
      %v1712 = vunpack.c.l.b16 %v1673
      %v1713 = vunpack.c.l.b16 %v1674
      %v1714 = vunpack.c.l.b16 %v1675
      %v1715 = vunpack.c.l.b16 %v1676
      %v1716 = vunpack.c.l.b16 %v1677
      %v1717 = vunpack.c.l.b16 %v1678
      %v1718 = vunpack.c.l.b16 %v1679
      %v1719 = vunpack.c.l.b16 %v1680
      %v1720 = vunpack.c.l.b16 %v1681
      %v1721 = vunpack.c.l.b16 %v1682
      %v1722 = vunpack.c.l.b16 %v1683
      %v1723 = vpack.c.b16 %v1708, %v1707
      %v1724 = vpack.c.b16 %v1710, %v1709
      %v1725 = vpack.c.b16 %v1712, %v1711
      %v1726 = vpack.c.b16 %v1714, %v1713
      %v1727 = vpack.c.b16 %v1716, %v1715
      %v1728 = vpack.c.b16 %v1718, %v1717
      %v1729 = vpack.c.b16 %v1720, %v1719
      %v1730 = vpack.c.b16 %v1722, %v1721
      %1739 = vmatprep.subr.bf16.mxu0 0
      %1740 = vmatpush1.bf16.msra.mxu0 %v1723
      %1741 = vmatprep.subr.bf16.mxu0 0
      %1742 = vmatpush1.bf16.msra.mxu0 %v1724
      %1743 = vmatprep.subr.bf16.mxu0 0
      %1744 = vmatpush1.bf16.msra.mxu0 %v1725
      %1745 = vmatprep.subr.bf16.mxu0 0
      %1746 = vmatpush1.bf16.msra.mxu0 %v1726
      %1747 = vmatprep.subr.bf16.mxu0 0
      %1748 = vmatpush1.bf16.msra.mxu0 %v1727
      %1749 = vmatprep.subr.bf16.mxu0 0
      %1750 = vmatpush1.bf16.msra.mxu0 %v1728
      %1751 = vmatprep.subr.bf16.mxu0 0
      %1752 = vmatpush1.bf16.msra.mxu0 %v1729
      %1753 = vmatprep.subr.bf16.mxu0 0
      %1754 = vmatpush1.bf16.msra.mxu0 %v1730
      %1755 = vmatprep.subr.bf16.mxu0 0
      %1756 = vmatpush1.bf16.msra.mxu0 0
      %1757 = vmatprep.subr.bf16.mxu0 0
      %1758 = vmatpush1.bf16.msra.mxu0 0
      %1759 = vmatprep.subr.bf16.mxu0 0
      %1760 = vmatpush1.bf16.msra.mxu0 0
      %1761 = vmatprep.subr.bf16.mxu0 0
      %1762 = vmatpush1.bf16.msra.mxu0 0
      %1763 = vmatprep.subr.bf16.mxu0 0
      %1764 = vmatpush1.bf16.msra.mxu0 0
      %1765 = vmatprep.subr.bf16.mxu0 0
      %1766 = vmatpush1.bf16.msra.mxu0 0
      %1767 = vmatprep.subr.bf16.mxu0 0
      %1768 = vmatpush1.bf16.msra.mxu0 0
      %1769 = vmatprep.subr.bf16.mxu0 0
      %1770 = vmatpush1.bf16.msra.mxu0 0
      %1771 = vmatprep.mubr.bf16.mxu0 0
      %1772 = vmatmul.mubr.bf16.gmra.mrb[0].mxu0 %v1660
      %v1773 = vpop.f32.mrb[0].mxu0
      %v1774 = vadd.f32 %v1689, %v1773
      %v1775 = vpop.f32.mrb[0].mxu0
      %v1776 = vpop.f32.mrb[0].mxu0
      %v1777 = vadd.f32 %v1689, %v1776
      %v1778 = vpop.f32.mrb[0].mxu0
      %1779 = vmatprep.mubr.bf16.mxu0 0
      %1780 = vmatmul.mubr.bf16.gmra.mrb[0].mxu0 %v1661
      %v1781 = vpop.f32.mrb[0].mxu0
      %v1782 = vadd.f32 %v1689, %v1781
      %v1783 = vpop.f32.mrb[0].mxu0
      %v1784 = vpop.f32.mrb[0].mxu0
      %v1785 = vadd.f32 %v1689, %v1784
      %v1786 = vpop.f32.mrb[0].mxu0
      %1787 = vmatprep.mubr.bf16.mxu0 0
      %1788 = vmatmul.mubr.bf16.gmra.mrb[0].mxu0 %v1662
      %v1789 = vpop.f32.mrb[0].mxu0
      %v1790 = vadd.f32 %v1689, %v1789
      %v1791 = vpop.f32.mrb[0].mxu0
      %v1792 = vpop.f32.mrb[0].mxu0
      %v1793 = vadd.f32 %v1689, %v1792
      %v1794 = vpop.f32.mrb[0].mxu0
      %1795 = vmatprep.mubr.bf16.mxu0 0
      %1796 = vmatmul.mubr.bf16.gmra.mrb[0].mxu0 %v1663
      %v1797 = vpop.f32.mrb[0].mxu0
      %v1798 = vadd.f32 %v1689, %v1797
      %v1799 = vpop.f32.mrb[0].mxu0
      %v1800 = vpop.f32.mrb[0].mxu0
      %v1801 = vadd.f32 %v1689, %v1800
      %v1802 = vpop.f32.mrb[0].mxu0
      %1803 = vmatprep.mubr.bf16.mxu0 0
      %1804 = vmatmul.mubr.bf16.gmra.mrb[0].mxu0 %v1664
      %v1805 = vpop.f32.mrb[0].mxu0
      %v1806 = vadd.f32 %v1689, %v1805
      %v1807 = vpop.f32.mrb[0].mxu0
      %v1808 = vpop.f32.mrb[0].mxu0
      %v1809 = vadd.f32 %v1689, %v1808
      %v1810 = vpop.f32.mrb[0].mxu0
      %1811 = vmatprep.mubr.bf16.mxu0 0
      %1812 = vmatmul.mubr.bf16.gmra.mrb[0].mxu0 %v1665
      %v1813 = vpop.f32.mrb[0].mxu0
      %v1814 = vadd.f32 %v1689, %v1813
      %v1815 = vpop.f32.mrb[0].mxu0
      %v1816 = vpop.f32.mrb[0].mxu0
      %v1817 = vadd.f32 %v1689, %v1816
      %v1818 = vpop.f32.mrb[0].mxu0
      %1819 = vmatprep.mubr.bf16.mxu0 0
      %1820 = vmatmul.mubr.bf16.gmra.mrb[0].mxu0 %v1666
      %v1821 = vpop.f32.mrb[0].mxu0
      %v1822 = vadd.f32 %v1689, %v1821
      %v1823 = vpop.f32.mrb[0].mxu0
      %v1824 = vpop.f32.mrb[0].mxu0
      %v1825 = vadd.f32 %v1689, %v1824
      %v1826 = vpop.f32.mrb[0].mxu0
      %1827 = vmatprep.mubr.bf16.mxu0 0
      %1828 = vmatmul.mubr.bf16.gmra.mrb[0].mxu0 %v1667
      %v1829 = vpop.f32.mrb[0].mxu0
      %v1830 = vadd.f32 %v1689, %v1829
      %v1831 = vpop.f32.mrb[0].mxu0
      %v1832 = vpop.f32.mrb[0].mxu0
      %v1833 = vadd.f32 %v1689, %v1832
      %v1834 = vpop.f32.mrb[0].mxu0
      %1835 = vdwg.mxu0
      %v1836 = vxor.u32 %v1774, 2147483648
      %v1837 = vxor.u32 %v1777, 2147483648
      %v1838 = vxor.u32 %v1782, 2147483648
      %v1839 = vxor.u32 %v1785, 2147483648
      %v1840 = vxor.u32 %v1790, 2147483648
      %v1841 = vxor.u32 %v1793, 2147483648
      %v1842 = vxor.u32 %v1798, 2147483648
      %v1843 = vxor.u32 %v1801, 2147483648
      %v1844 = vxor.u32 %v1806, 2147483648
      %v1845 = vxor.u32 %v1809, 2147483648
      %v1846 = vxor.u32 %v1814, 2147483648
      %v1847 = vxor.u32 %v1817, 2147483648
      %v1848 = vxor.u32 %v1822, 2147483648
      %v1849 = vxor.u32 %v1825, 2147483648
      %v1850 = vxor.u32 %v1830, 2147483648
      %v1851 = vxor.u32 %v1833, 2147483648
      %v1852 = vmul.f32 %v1836, 1.442695
      %v1853 = vpow.pop %v1852
      %v1854 = vmul.f32 %v1837, 1.442695
      %v1855 = vpow.pop %v1854
      %v1856 = vmul.f32 %v1838, 1.442695
      %v1857 = vpow.pop %v1856
      %v1858 = vmul.f32 %v1839, 1.442695
      %v1859 = vpow.pop %v1858
      %v1860 = vmul.f32 %v1840, 1.442695
      %v1861 = vpow.pop %v1860
      %v1862 = vmul.f32 %v1841, 1.442695
      %v1863 = vpow.pop %v1862
      %v1864 = vmul.f32 %v1842, 1.442695
      %v1865 = vpow.pop %v1864
      %v1866 = vmul.f32 %v1843, 1.442695
      %v1867 = vpow.pop %v1866
      %v1868 = vmul.f32 %v1844, 1.442695
      %v1869 = vpow.pop %v1868
      %v1870 = vmul.f32 %v1845, 1.442695
      %v1871 = vpow.pop %v1870
      %v1872 = vmul.f32 %v1846, 1.442695
      %v1873 = vpow.pop %v1872
      %v1874 = vmul.f32 %v1847, 1.442695
      %v1875 = vpow.pop %v1874
      %v1876 = vmul.f32 %v1848, 1.442695
      %v1877 = vpow.pop %v1876
      %v1878 = vmul.f32 %v1849, 1.442695
      %v1879 = vpow.pop %v1878
      %v1880 = vmul.f32 %v1850, 1.442695
      %v1881 = vpow.pop %v1880
      %v1882 = vmul.f32 %v1851, 1.442695
      %v1883 = vpow.pop %v1882
      %v1884 = vadd.f32 %v1853, 1.0
      %v1885 = vadd.f32 %v1855, 1.0
      %v1886 = vadd.f32 %v1857, 1.0
      %v1887 = vadd.f32 %v1859, 1.0
      %v1888 = vadd.f32 %v1861, 1.0
      %v1889 = vadd.f32 %v1863, 1.0
      %v1890 = vadd.f32 %v1865, 1.0
      %v1891 = vadd.f32 %v1867, 1.0
      %v1892 = vadd.f32 %v1869, 1.0
      %v1893 = vadd.f32 %v1871, 1.0
      %v1894 = vadd.f32 %v1873, 1.0
      %v1895 = vadd.f32 %v1875, 1.0
      %v1896 = vadd.f32 %v1877, 1.0
      %v1897 = vadd.f32 %v1879, 1.0
      %v1898 = vadd.f32 %v1881, 1.0
      %v1899 = vadd.f32 %v1883, 1.0
      %v1900 = vrcp.pop %v1884
      %v1901 = vmul.f32 1.0, %v1900
      %v1902 = vrcp.pop %v1885
      %v1903 = vmul.f32 1.0, %v1902
      %v1904 = vrcp.pop %v1886
      %v1905 = vmul.f32 1.0, %v1904
      %v1906 = vrcp.pop %v1887
      %v1907 = vmul.f32 1.0, %v1906
      %v1908 = vrcp.pop %v1888
      %v1909 = vmul.f32 1.0, %v1908
      %v1910 = vrcp.pop %v1889
      %v1911 = vmul.f32 1.0, %v1910
      %v1912 = vrcp.pop %v1890
      %v1913 = vmul.f32 1.0, %v1912
      %v1914 = vrcp.pop %v1891
      %v1915 = vmul.f32 1.0, %v1914
      %v1916 = vrcp.pop %v1892
      %v1917 = vmul.f32 1.0, %v1916
      %v1918 = vrcp.pop %v1893
      %v1919 = vmul.f32 1.0, %v1918
      %v1920 = vrcp.pop %v1894
      %v1921 = vmul.f32 1.0, %v1920
      %v1922 = vrcp.pop %v1895
      %v1923 = vmul.f32 1.0, %v1922
      %v1924 = vrcp.pop %v1896
      %v1925 = vmul.f32 1.0, %v1924
      %v1926 = vrcp.pop %v1897
      %v1927 = vmul.f32 1.0, %v1926
      %v1928 = vrcp.pop %v1898
      %v1929 = vmul.f32 1.0, %v1928
      %v1930 = vrcp.pop %v1899
      %v1931 = vmul.f32 1.0, %v1930
      %1932 = vst [vmem:[%s391] sm:$0xff] %v1901
      %1933 = vst [vmem:[%s391 + $0x8] sm:$0xff] %v1903
      %1934 = vst [vmem:[%s391 + $0x10] sm:$0xff] %v1905
      %1935 = vst [vmem:[%s391 + $0x18] sm:$0xff] %v1907
      %1936 = vst [vmem:[%s391 + $0x20] sm:$0xff] %v1909
      %1937 = vst [vmem:[%s391 + $0x28] sm:$0xff] %v1911
      %1938 = vst [vmem:[%s391 + $0x30] sm:$0xff] %v1913
      %1939 = vst [vmem:[%s391 + $0x38] sm:$0xff] %v1915
      %1940 = vst [vmem:[%s391 + $0x40] sm:$0xff] %v1917
      %1941 = vst [vmem:[%s391 + $0x48] sm:$0xff] %v1919
      %1942 = vst [vmem:[%s391 + $0x50] sm:$0xff] %v1921
      %1943 = vst [vmem:[%s391 + $0x58] sm:$0xff] %v1923
      %1944 = vst [vmem:[%s391 + $0x60] sm:$0xff] %v1925
      %1945 = vst [vmem:[%s391 + $0x68] sm:$0xff] %v1927
      %1946 = vst [vmem:[%s391 + $0x70] sm:$0xff] %v1929
      %1947 = vst [vmem:[%s391 + $0x78] sm:$0xff] %v1931
      %s1948 = smul.u32 16, %s22
      %p1949 = scmp.lt.s32.totalorder %s1948, 63
      %s1950 = scalar_select %p1949, %s1948, 63
      %s1951 = smul.addr %s1950, 8
      %s1952 = scalar_lea.vmem %s11, %s1951
      // Predicated region
      $region65: #{four_hidden_layers_forward.1} parent=63 // pred_check
        %p1953 = pneg %p276
      $region66: #{four_hidden_layers_forward.1} parent=63 // pred_check_branch
        %1955 = sbr.rel (%p1953) target = $region68
      $region67: #{four_hidden_layers_forward.1} parent=63 // pred_region
        %s1956 = smul.u32 16, %s22
      $region68: #{four_hidden_layers_forward.1} parent=63 // pred_fallthru
        _
    $region64: #{four_hidden_layers_forward.1} parent=5 // pred_fallthru
      _
    %p1957 = scmp.le.s32.totalorder 2, %s17
    // Predicated region
    $region69: #{four_hidden_layers_forward.1} parent=5 // pred_check
      %p1958 = pneg %p1957
    $region70: #{four_hidden_layers_forward.1} parent=5 // pred_check_branch
      %1960 = sbr.rel (%p1958) target = $region72
    $region71: #{four_hidden_layers_forward.1} parent=5 // pred_region
      %s1961 = ssub.s32 %s17, 2
      // Predicated region
      $region73: #{four_hidden_layers_forward.1} parent=71 // pred_check
        %p1962 = pneg %p282
      $region74: #{four_hidden_layers_forward.1} parent=71 // pred_check_branch
        %1964 = sbr.rel (%p1962) target = $region76
      $region75: #{four_hidden_layers_forward.1} parent=71 // pred_region
        %s1965 = smul.u32 16, %s23
        %p1966 = scmp.lt.s32.totalorder %s1965, 63
        %s1967 = scalar_select %p1966, %s1965, 63
        %s1968 = smul.addr %s1967, 8
        %s1969 = scalar_lea.vmem %s11, %s1968
      $region76: #{four_hidden_layers_forward.1} parent=71 // pred_fallthru
        _
    $region72: #{four_hidden_layers_forward.1} parent=5 // pred_fallthru
      _
  $region6: #{four_hidden_layers_forward.1} parent=0 // loop_footer
    %s21 = sadd.s32 1, %s17
  $region7: #{four_hidden_layers_forward.1} parent=0 // loop_footer_branch
    %16 = sbr.rel target = $region3
  $region8: #{four_hidden_layers_forward.1} parent=0 // loop_exit
    _

</llo_original>
